<compile_context>
chip_gen: v6e
topology: v6e:2x2x1
jax: 0.10.0
libtpu: 0.0.40
codegen_flags: <defaults>
</compile_context>

<pallas_src>
import functools

import jax
import jax.numpy as jnp
from jax.experimental import pallas as pl
from jax.experimental.pallas import tpu as pltpu

BN_EPS = 1e-5


def resblock_kernel(x_ref, g1_ref, b1_ref, g2_ref, b2_ref,
                    q_ref, pdn_ref, pup_ref, m1_ref, m2_ref, o_ref,
                    *, channels):
    # x_ref: (N*H, W*C) lane-dense activation slab (f32).
    R, L = x_ref.shape
    inv_cnt = 1.0 / float(R * (L // channels))   # 1 / (N*H*W)

    x = x_ref[...]
    q = q_ref[...]      # (L, L)  Q[i,j] = 1 if (i%C == j%C): channel fold + lane broadcast
    pdn = pdn_ref[...]  # (R, R)  masked row shift: row h receives row h-1 of same image
    pup = pup_ref[...]  # (R, R)  masked row shift: row h receives row h+1 of same image

    def ch_mean(v):
        # Per-channel mean over (N, H, W), broadcast back to every lane of that channel.
        s = jnp.dot(v, q, preferred_element_type=jnp.float32)   # (R, L)
        return jnp.sum(s, axis=0, keepdims=True) * inv_cnt      # (1, L)

    def bn_relu(a, g_l, b_l):
        mean_l = ch_mean(a)
        cen = a - mean_l
        var_l = ch_mean(cen * cen)                        # two-pass (biased) variance
        scale_l = g_l * jax.lax.rsqrt(var_l + BN_EPS)     # hoisted affine: one FMA/elem
        shift_l = b_l - mean_l * scale_l
        return jnp.maximum(a * scale_l + shift_l, 0.0)

    def conv3x3(a, m_ref):
        # dx shift + Cin->Cout mixing are folded into the (W*C, W*C) banded matrices;
        # dy taps are handled by the masked row-shift matmuls (zero padding implicit).
        t0 = jnp.dot(a, m_ref[0], preferred_element_type=jnp.float32)
        t1 = jnp.dot(a, m_ref[1], preferred_element_type=jnp.float32)
        t2 = jnp.dot(a, m_ref[2], preferred_element_type=jnp.float32)
        return (jnp.dot(pdn, t0, preferred_element_type=jnp.float32) + t1
                + jnp.dot(pup, t2, preferred_element_type=jnp.float32))

    a1 = bn_relu(x, g1_ref[...], b1_ref[...])
    y1 = conv3x3(a1, m1_ref)
    a2 = bn_relu(y1, g2_ref[...], b2_ref[...])
    y2 = conv3x3(a2, m2_ref)

    o_ref[...] = (y2 + x).astype(o_ref.dtype)


def _channel_fold_matrix(width, c):
    l = width * c
    li = jnp.arange(l)
    return (li[:, None] % c == li[None, :] % c).astype(jnp.float32)


def _row_shift_matrices(n, h):
    r = n * h
    ro = jnp.arange(r)[:, None]
    ri = jnp.arange(r)[None, :]
    pdn = ((ri == ro - 1) & (ro % h != 0)).astype(jnp.float32)       # y[h] += T0[h-1]
    pup = ((ri == ro + 1) & (ro % h != h - 1)).astype(jnp.float32)   # y[h] += T2[h+1]
    return pdn, pup


def _prep_conv_matrices(w_oihw, width):
    """torch OIHW (Cout, Cin, 3, 3) -> (3, W*C, W*C) banded matrices, one per dy."""
    c = w_oihw.shape[0]
    k = jnp.transpose(w_oihw, (2, 3, 1, 0)).astype(jnp.float32)  # (dy, dx, cin, cout)
    wi = jnp.arange(width)
    band = (wi[None, :, None] ==
            wi[None, None, :] + jnp.arange(3)[:, None, None] - 1).astype(jnp.float32)
    # M[dy, w_in*C+cin, w_out*C+cout] = k[dy, w_in-w_out+1, cin, cout] (0 outside band)
    m = jnp.einsum("xio,yxab->yiaob", band, k).reshape(3, width * c, width * c)
    return m


def resblock_pallas(x_nchw, gamma1, beta1, w1_oihw, gamma2, beta2, w2_oihw):
    """x_nchw: (N, C, H, W) like the torch module; returns NCHW."""
    n, c, h, w = x_nchw.shape
    r, l = n * h, w * c

    # Lane-dense (N*H, W*C) activation slab.
    x_slab = jnp.transpose(x_nchw, (0, 2, 3, 1)).reshape(r, l).astype(jnp.float32)

    # BN affine params pre-expanded to the lane layout (lane w*C+c -> gamma[c]).
    g1 = jnp.tile(gamma1, (w,)).reshape(1, l).astype(jnp.float32)
    b1 = jnp.tile(beta1, (w,)).reshape(1, l).astype(jnp.float32)
    g2 = jnp.tile(gamma2, (w,)).reshape(1, l).astype(jnp.float32)
    b2 = jnp.tile(beta2, (w,)).reshape(1, l).astype(jnp.float32)

    q = _channel_fold_matrix(w, c)
    pdn, pup = _row_shift_matrices(n, h)
    m1 = _prep_conv_matrices(w1_oihw, w)
    m2 = _prep_conv_matrices(w2_oihw, w)

    vmem = pl.BlockSpec(memory_space=pltpu.MemorySpace.VMEM)
    out_slab = pl.pallas_call(
        functools.partial(resblock_kernel, channels=c),
        out_shape=jax.ShapeDtypeStruct((r, l), x_nchw.dtype),
        in_specs=[vmem] * 10,
        out_specs=vmem,
        compiler_params=pltpu.CompilerParams(vmem_limit_bytes=32 << 20),
    )(x_slab, g1, b1, g2, b2, q, pdn, pup, m1, m2)

    return jnp.transpose(out_slab.reshape(n, h, w, c), (0, 3, 1, 2))


def resblock_ref(x, g1, b1, w1_oihw, g2, b2, w2_oihw):
    """Pure-JAX reference mirroring the torch forward (NCHW / OIHW)."""
    def bn_relu(v, g, b):
        mean = jnp.mean(v, axis=(0, 2, 3), keepdims=True)
        var = jnp.var(v, axis=(0, 2, 3), keepdims=True)
        vh = (v - mean) / jnp.sqrt(var + BN_EPS)
        return jnp.maximum(vh * g.reshape(1, -1, 1, 1) + b.reshape(1, -1, 1, 1), 0.0)

    def conv(v, wgt):
        return jax.lax.conv_general_dilated(
            v, wgt, window_strides=(1, 1), padding=((1, 1), (1, 1)),
            dimension_numbers=("NCHW", "OIHW", "NCHW"))

    a = bn_relu(x, g1, b1)
    y = conv(a, w1_oihw)
    a = bn_relu(y, g2, b2)
    y = conv(a, w2_oihw)
    return y + x


if __name__ == "__main__":
    key = jax.random.PRNGKey(0)
    N, C, H, W = 2, 4, 16, 16
    kx, kw1, kw2, kg1, kb1, kg2, kb2 = jax.random.split(key, 7)

    x = jax.random.normal(kx, (N, C, H, W), dtype=jnp.float32)

    # Conv2d(in_channels, in_channels, 3, padding=1, bias=False) -> weight (C, C, 3, 3)
    w1_oihw = jax.random.normal(kw1, (C, C, 3, 3), dtype=jnp.float32) * 0.1
    w2_oihw = jax.random.normal(kw2, (C, C, 3, 3), dtype=jnp.float32) * 0.1
    # BatchNorm2d(in_channels) affine params, shape (C,)
    gamma1 = 1.0 + 0.1 * jax.random.normal(kg1, (C,), dtype=jnp.float32)
    beta1 = 0.1 * jax.random.normal(kb1, (C,), dtype=jnp.float32)
    gamma2 = 1.0 + 0.1 * jax.random.normal(kg2, (C,), dtype=jnp.float32)
    beta2 = 0.1 * jax.random.normal(kb2, (C,), dtype=jnp.float32)

    out = resblock_pallas(x, gamma1, beta1, w1_oihw, gamma2, beta2, w2_oihw)
    out = jax.block_until_ready(out)

    ref = resblock_ref(x, gamma1, beta1, w1_oihw, gamma2, beta2, w2_oihw)
    assert out.shape == (N, C, H, W)
    err = float(jnp.max(jnp.abs(out - ref)))
    assert jnp.allclose(out, ref, atol=5e-3, rtol=5e-3), err

    print("KERNEL_OK")
</pallas_src>

<mosaic_0001>
module attributes {stable_mosaic.version = 11 : i64} {
  func.func @resblock_kernel(%arg0: memref<32x64xf32, #tpu.memory_space<vmem>>, %arg1: memref<1x64xf32, #tpu.memory_space<vmem>>, %arg2: memref<1x64xf32, #tpu.memory_space<vmem>>, %arg3: memref<1x64xf32, #tpu.memory_space<vmem>>, %arg4: memref<1x64xf32, #tpu.memory_space<vmem>>, %arg5: memref<64x64xf32, #tpu.memory_space<vmem>>, %arg6: memref<32x32xf32, #tpu.memory_space<vmem>>, %arg7: memref<32x32xf32, #tpu.memory_space<vmem>>, %arg8: memref<3x64x64xf32, #tpu.memory_space<vmem>>, %arg9: memref<3x64x64xf32, #tpu.memory_space<vmem>>, %arg10: memref<32x64xf32, #tpu.memory_space<vmem>>) attributes {dimension_semantics = [], scalar_prefetch = 0 : i64, scratch_operands = 0 : i64, tpu.core_type = #tpu.core_type<tc>} {
    %c0 = arith.constant 0 : index
    %c0_0 = arith.constant 0 : index
    %0 = vector.load %arg0[%c0, %c0_0] : memref<32x64xf32, #tpu.memory_space<vmem>>, vector<32x64xf32>
    %c0_1 = arith.constant 0 : index
    %c0_2 = arith.constant 0 : index
    %1 = vector.load %arg5[%c0_1, %c0_2] : memref<64x64xf32, #tpu.memory_space<vmem>>, vector<64x64xf32>
    %c0_3 = arith.constant 0 : index
    %c0_4 = arith.constant 0 : index
    %2 = vector.load %arg6[%c0_3, %c0_4] : memref<32x32xf32, #tpu.memory_space<vmem>>, vector<32x32xf32>
    %c0_5 = arith.constant 0 : index
    %c0_6 = arith.constant 0 : index
    %3 = vector.load %arg7[%c0_5, %c0_6] : memref<32x32xf32, #tpu.memory_space<vmem>>, vector<32x32xf32>
    %c0_7 = arith.constant 0 : index
    %c0_8 = arith.constant 0 : index
    %4 = vector.load %arg1[%c0_7, %c0_8] : memref<1x64xf32, #tpu.memory_space<vmem>>, vector<1x64xf32>
    %c0_9 = arith.constant 0 : index
    %c0_10 = arith.constant 0 : index
    %5 = vector.load %arg2[%c0_9, %c0_10] : memref<1x64xf32, #tpu.memory_space<vmem>>, vector<1x64xf32>
    %cst = arith.constant dense<0.000000e+00> : vector<32x64xf32>
    %6 = tpu.matmul %0, %1, %cst {dimension_numbers = #tpu.dot_dimension_numbers<[1], [0], [0], [1], [0, 0, 1, 1], [], []>} : vector<32x64xf32>, vector<64x64xf32>, vector<32x64xf32> -> vector<32x64xf32>
    %cst_11 = arith.constant dense<0.000000e+00> : vector<64xf32>
    %7 = vector.multi_reduction <add>, %6, %cst_11 [0] : vector<32x64xf32> to vector<64xf32>
    %8 = vector.shape_cast %7 : vector<64xf32> to vector<1x64xf32>
    %cst_12 = arith.constant 0.001953125 : f32
    %9 = vector.broadcast %cst_12 : f32 to vector<1x64xf32>
    %10 = arith.mulf %8, %9 : vector<1x64xf32>
    %11 = vector.broadcast %10 : vector<1x64xf32> to vector<32x64xf32>
    %12 = arith.subf %0, %11 : vector<32x64xf32>
    %13 = arith.mulf %12, %12 : vector<32x64xf32>
    %cst_13 = arith.constant dense<0.000000e+00> : vector<32x64xf32>
    %14 = tpu.matmul %13, %1, %cst_13 {dimension_numbers = #tpu.dot_dimension_numbers<[1], [0], [0], [1], [0, 0, 1, 1], [], []>} : vector<32x64xf32>, vector<64x64xf32>, vector<32x64xf32> -> vector<32x64xf32>
    %cst_14 = arith.constant dense<0.000000e+00> : vector<64xf32>
    %15 = vector.multi_reduction <add>, %14, %cst_14 [0] : vector<32x64xf32> to vector<64xf32>
    %16 = vector.shape_cast %15 : vector<64xf32> to vector<1x64xf32>
    %cst_15 = arith.constant 0.001953125 : f32
    %17 = vector.broadcast %cst_15 : f32 to vector<1x64xf32>
    %18 = arith.mulf %16, %17 : vector<1x64xf32>
    %cst_16 = arith.constant 9.99999974E-6 : f32
    %19 = vector.broadcast %cst_16 : f32 to vector<1x64xf32>
    %20 = arith.addf %18, %19 : vector<1x64xf32>
    %21 = math.rsqrt %20 : vector<1x64xf32>
    %22 = arith.mulf %4, %21 : vector<1x64xf32>
    %23 = arith.mulf %10, %22 : vector<1x64xf32>
    %24 = arith.subf %5, %23 : vector<1x64xf32>
    %25 = vector.broadcast %22 : vector<1x64xf32> to vector<32x64xf32>
    %26 = arith.mulf %0, %25 : vector<32x64xf32>
    %27 = vector.broadcast %24 : vector<1x64xf32> to vector<32x64xf32>
    %28 = arith.addf %26, %27 : vector<32x64xf32>
    %cst_17 = arith.constant 0.000000e+00 : f32
    %29 = vector.broadcast %cst_17 : f32 to vector<32x64xf32>
    %30 = arith.maximumf %28, %29 : vector<32x64xf32>
    %c0_18 = arith.constant 0 : index
    %c0_19 = arith.constant 0 : index
    %c0_20 = arith.constant 0 : index
    %31 = vector.load %arg8[%c0_18, %c0_19, %c0_20] : memref<3x64x64xf32, #tpu.memory_space<vmem>>, vector<1x64x64xf32>
    %32 = vector.shape_cast %31 : vector<1x64x64xf32> to vector<64x64xf32>
    %cst_21 = arith.constant dense<0.000000e+00> : vector<32x64xf32>
    %33 = tpu.matmul %30, %32, %cst_21 {dimension_numbers = #tpu.dot_dimension_numbers<[1], [0], [0], [1], [0, 0, 1, 1], [], []>} : vector<32x64xf32>, vector<64x64xf32>, vector<32x64xf32> -> vector<32x64xf32>
    %c1 = arith.constant 1 : index
    %c0_22 = arith.constant 0 : index
    %c0_23 = arith.constant 0 : index
    %34 = vector.load %arg8[%c1, %c0_22, %c0_23] : memref<3x64x64xf32, #tpu.memory_space<vmem>>, vector<1x64x64xf32>
    %35 = vector.shape_cast %34 : vector<1x64x64xf32> to vector<64x64xf32>
    %cst_24 = arith.constant dense<0.000000e+00> : vector<32x64xf32>
    %36 = tpu.matmul %30, %35, %cst_24 {dimension_numbers = #tpu.dot_dimension_numbers<[1], [0], [0], [1], [0, 0, 1, 1], [], []>} : vector<32x64xf32>, vector<64x64xf32>, vector<32x64xf32> -> vector<32x64xf32>
    %c2 = arith.constant 2 : index
    %c0_25 = arith.constant 0 : index
    %c0_26 = arith.constant 0 : index
    %37 = vector.load %arg8[%c2, %c0_25, %c0_26] : memref<3x64x64xf32, #tpu.memory_space<vmem>>, vector<1x64x64xf32>
    %38 = vector.shape_cast %37 : vector<1x64x64xf32> to vector<64x64xf32>
    %cst_27 = arith.constant dense<0.000000e+00> : vector<32x64xf32>
    %39 = tpu.matmul %30, %38, %cst_27 {dimension_numbers = #tpu.dot_dimension_numbers<[1], [0], [0], [1], [0, 0, 1, 1], [], []>} : vector<32x64xf32>, vector<64x64xf32>, vector<32x64xf32> -> vector<32x64xf32>
    %cst_28 = arith.constant dense<0.000000e+00> : vector<32x64xf32>
    %40 = tpu.matmul %2, %33, %cst_28 {dimension_numbers = #tpu.dot_dimension_numbers<[1], [0], [0], [1], [0, 0, 1, 1], [], []>} : vector<32x32xf32>, vector<32x64xf32>, vector<32x64xf32> -> vector<32x64xf32>
    %41 = arith.addf %40, %36 : vector<32x64xf32>
    %cst_29 = arith.constant dense<0.000000e+00> : vector<32x64xf32>
    %42 = tpu.matmul %3, %39, %cst_29 {dimension_numbers = #tpu.dot_dimension_numbers<[1], [0], [0], [1], [0, 0, 1, 1], [], []>} : vector<32x32xf32>, vector<32x64xf32>, vector<32x64xf32> -> vector<32x64xf32>
    %43 = arith.addf %41, %42 : vector<32x64xf32>
    %c0_30 = arith.constant 0 : index
    %c0_31 = arith.constant 0 : index
    %44 = vector.load %arg3[%c0_30, %c0_31] : memref<1x64xf32, #tpu.memory_space<vmem>>, vector<1x64xf32>
    %c0_32 = arith.constant 0 : index
    %c0_33 = arith.constant 0 : index
    %45 = vector.load %arg4[%c0_32, %c0_33] : memref<1x64xf32, #tpu.memory_space<vmem>>, vector<1x64xf32>
    %cst_34 = arith.constant dense<0.000000e+00> : vector<32x64xf32>
    %46 = tpu.matmul %43, %1, %cst_34 {dimension_numbers = #tpu.dot_dimension_numbers<[1], [0], [0], [1], [0, 0, 1, 1], [], []>} : vector<32x64xf32>, vector<64x64xf32>, vector<32x64xf32> -> vector<32x64xf32>
    %cst_35 = arith.constant dense<0.000000e+00> : vector<64xf32>
    %47 = vector.multi_reduction <add>, %46, %cst_35 [0] : vector<32x64xf32> to vector<64xf32>
    %48 = vector.shape_cast %47 : vector<64xf32> to vector<1x64xf32>
    %cst_36 = arith.constant 0.001953125 : f32
    %49 = vector.broadcast %cst_36 : f32 to vector<1x64xf32>
    %50 = arith.mulf %48, %49 : vector<1x64xf32>
    %51 = vector.broadcast %50 : vector<1x64xf32> to vector<32x64xf32>
    %52 = arith.subf %43, %51 : vector<32x64xf32>
    %53 = arith.mulf %52, %52 : vector<32x64xf32>
    %cst_37 = arith.constant dense<0.000000e+00> : vector<32x64xf32>
    %54 = tpu.matmul %53, %1, %cst_37 {dimension_numbers = #tpu.dot_dimension_numbers<[1], [0], [0], [1], [0, 0, 1, 1], [], []>} : vector<32x64xf32>, vector<64x64xf32>, vector<32x64xf32> -> vector<32x64xf32>
    %cst_38 = arith.constant dense<0.000000e+00> : vector<64xf32>
    %55 = vector.multi_reduction <add>, %54, %cst_38 [0] : vector<32x64xf32> to vector<64xf32>
    %56 = vector.shape_cast %55 : vector<64xf32> to vector<1x64xf32>
    %cst_39 = arith.constant 0.001953125 : f32
    %57 = vector.broadcast %cst_39 : f32 to vector<1x64xf32>
    %58 = arith.mulf %56, %57 : vector<1x64xf32>
    %cst_40 = arith.constant 9.99999974E-6 : f32
    %59 = vector.broadcast %cst_40 : f32 to vector<1x64xf32>
    %60 = arith.addf %58, %59 : vector<1x64xf32>
    %61 = math.rsqrt %60 : vector<1x64xf32>
    %62 = arith.mulf %44, %61 : vector<1x64xf32>
    %63 = arith.mulf %50, %62 : vector<1x64xf32>
    %64 = arith.subf %45, %63 : vector<1x64xf32>
    %65 = vector.broadcast %62 : vector<1x64xf32> to vector<32x64xf32>
    %66 = arith.mulf %43, %65 : vector<32x64xf32>
    %67 = vector.broadcast %64 : vector<1x64xf32> to vector<32x64xf32>
    %68 = arith.addf %66, %67 : vector<32x64xf32>
    %cst_41 = arith.constant 0.000000e+00 : f32
    %69 = vector.broadcast %cst_41 : f32 to vector<32x64xf32>
    %70 = arith.maximumf %68, %69 : vector<32x64xf32>
    %c0_42 = arith.constant 0 : index
    %c0_43 = arith.constant 0 : index
    %c0_44 = arith.constant 0 : index
    %71 = vector.load %arg9[%c0_42, %c0_43, %c0_44] : memref<3x64x64xf32, #tpu.memory_space<vmem>>, vector<1x64x64xf32>
    %72 = vector.shape_cast %71 : vector<1x64x64xf32> to vector<64x64xf32>
    %cst_45 = arith.constant dense<0.000000e+00> : vector<32x64xf32>
    %73 = tpu.matmul %70, %72, %cst_45 {dimension_numbers = #tpu.dot_dimension_numbers<[1], [0], [0], [1], [0, 0, 1, 1], [], []>} : vector<32x64xf32>, vector<64x64xf32>, vector<32x64xf32> -> vector<32x64xf32>
    %c1_46 = arith.constant 1 : index
    %c0_47 = arith.constant 0 : index
    %c0_48 = arith.constant 0 : index
    %74 = vector.load %arg9[%c1_46, %c0_47, %c0_48] : memref<3x64x64xf32, #tpu.memory_space<vmem>>, vector<1x64x64xf32>
    %75 = vector.shape_cast %74 : vector<1x64x64xf32> to vector<64x64xf32>
    %cst_49 = arith.constant dense<0.000000e+00> : vector<32x64xf32>
    %76 = tpu.matmul %70, %75, %cst_49 {dimension_numbers = #tpu.dot_dimension_numbers<[1], [0], [0], [1], [0, 0, 1, 1], [], []>} : vector<32x64xf32>, vector<64x64xf32>, vector<32x64xf32> -> vector<32x64xf32>
    %c2_50 = arith.constant 2 : index
    %c0_51 = arith.constant 0 : index
    %c0_52 = arith.constant 0 : index
    %77 = vector.load %arg9[%c2_50, %c0_51, %c0_52] : memref<3x64x64xf32, #tpu.memory_space<vmem>>, vector<1x64x64xf32>
    %78 = vector.shape_cast %77 : vector<1x64x64xf32> to vector<64x64xf32>
    %cst_53 = arith.constant dense<0.000000e+00> : vector<32x64xf32>
    %79 = tpu.matmul %70, %78, %cst_53 {dimension_numbers = #tpu.dot_dimension_numbers<[1], [0], [0], [1], [0, 0, 1, 1], [], []>} : vector<32x64xf32>, vector<64x64xf32>, vector<32x64xf32> -> vector<32x64xf32>
    %cst_54 = arith.constant dense<0.000000e+00> : vector<32x64xf32>
    %80 = tpu.matmul %2, %73, %cst_54 {dimension_numbers = #tpu.dot_dimension_numbers<[1], [0], [0], [1], [0, 0, 1, 1], [], []>} : vector<32x32xf32>, vector<32x64xf32>, vector<32x64xf32> -> vector<32x64xf32>
    %81 = arith.addf %80, %76 : vector<32x64xf32>
    %cst_55 = arith.constant dense<0.000000e+00> : vector<32x64xf32>
    %82 = tpu.matmul %3, %79, %cst_55 {dimension_numbers = #tpu.dot_dimension_numbers<[1], [0], [0], [1], [0, 0, 1, 1], [], []>} : vector<32x32xf32>, vector<32x64xf32>, vector<32x64xf32> -> vector<32x64xf32>
    %83 = arith.addf %81, %82 : vector<32x64xf32>
    %84 = arith.addf %83, %0 : vector<32x64xf32>
    %c0_56 = arith.constant 0 : index
    %c0_57 = arith.constant 0 : index
    %85 = vector.load %arg10[%c0_56, %c0_57] : memref<32x64xf32, #tpu.memory_space<vmem>>, vector<32x64xf32>
    tpu.vector_store %arg10[%c0_56, %c0_57], %84 {strides = array<i32>} : memref<32x64xf32, #tpu.memory_space<vmem>>, vector<32x64xf32>,
    return
  }
}

</mosaic_0001>

<llo_original>
// kernel: tpu_custom_call.1
$region0: #{tpu_custom_call.1}
  #allocation0 [shape = 'u32[]', space=smem, size = 0x4, offset = 0x4, fixed_abs, tag = 'smem constant byte address 0x4 - core index']
  #allocation1 [shape = 'u32[144,128]{1,0:T(1,128)}', space=vmem, size = 0x12000, scoped, tag = 'internal scratch']
  %s0 = inlined_call_operand.hbm [shape: f32[32,64], index: 0, kind: input, shape index: {}]
  %s1 = inlined_call_operand.vmem [shape: f32[1,64], index: 1, kind: input, shape index: {}]
  %s2 = inlined_call_operand.vmem [shape: f32[1,64], index: 2, kind: input, shape index: {}]
  %s3 = inlined_call_operand.vmem [shape: f32[1,64], index: 3, kind: input, shape index: {}]
  %s4 = inlined_call_operand.vmem [shape: f32[1,64], index: 4, kind: input, shape index: {}]
  %s5 = inlined_call_operand.hbm [shape: f32[64,64], index: 5, kind: input, shape index: {}]
  %s6 = inlined_call_operand.hbm [shape: f32[32,32], index: 6, kind: input, shape index: {}]
  %s7 = inlined_call_operand.hbm [shape: f32[32,32], index: 7, kind: input, shape index: {}]
  %s8 = inlined_call_operand.hbm [shape: f32[3,64,64], index: 8, kind: input, shape index: {}]
  %s9 = inlined_call_operand.hbm [shape: f32[3,64,64], index: 9, kind: input, shape index: {}]
  %s10 = inlined_call_operand.hbm [shape: f32[32,64], index: 10, kind: output, shape index: {}]
  %s11 = sld [smem:[#allocation0]]
  $region74: #{tpu_custom_call.1} parent=0
    _
  %s13 = ssub.s32 1, %s11
  %s14 = scalar_select 0, %s13, %s11
  $region1: #{tpu_custom_call.1} parent=0
    #allocation2 [shape = 'u8[16384]{0}', space=vmem, size = 0x4000, scoped, tag = 'input window, operand 0, single buffered']
    #allocation3 [shape = 's32[1]{0}', space=sflag, size = 0x4, scoped, tag = 'scoped memory for tpu_custom_call.1']
    #allocation4 [shape = 's32[1]{0}', space=sflag, size = 0x4, scoped, tag = 'scoped memory for tpu_custom_call.1']
    #allocation5 [shape = 'u8[32768]{0}', space=vmem, size = 0x8000, scoped, tag = 'input window, operand 5, single buffered']
    #allocation6 [shape = 's32[1]{0}', space=sflag, size = 0x4, scoped, tag = 'scoped memory for tpu_custom_call.1']
    #allocation7 [shape = 'u8[16384]{0}', space=vmem, size = 0x4000, scoped, tag = 'input window, operand 6, single buffered']
    #allocation8 [shape = 'u8[16384]{0}', space=vmem, size = 0x4000, scoped, tag = 'input window, operand 7, single buffered']
    #allocation9 [shape = 's32[1]{0}', space=sflag, size = 0x4, scoped, tag = 'scoped memory for tpu_custom_call.1']
    #allocation10 [shape = 'u8[98304]{0}', space=vmem, size = 0x18000, scoped, tag = 'input window, operand 8, single buffered']
    #allocation11 [shape = 'u8[98304]{0}', space=vmem, size = 0x18000, scoped, tag = 'input window, operand 9, single buffered']
    #allocation12 [shape = 's32[1]{0}', space=sflag, size = 0x4, scoped, tag = 'scoped memory for tpu_custom_call.1']
    #allocation13 [shape = 'u8[16384]{0}', space=vmem, size = 0x4000, scoped, tag = 'output window, operand 0, single buffered']
    %15 = vsyncpa [#allocation3], 0
    %16 = vsyncpa [#allocation6], 0
    %17 = vsyncpa [#allocation9], 0
    %18 = vsyncpa [#allocation12], 0
    %19 = vsyncpa [#allocation4], 0
    // Predicated region
    $region2: #{tpu_custom_call.1} parent=1 // pred_check
      _
    $region3: #{tpu_custom_call.1} parent=1 // pred_check_branch
      %21 = sbr.rel (0) target = $region5
    $region4: #{tpu_custom_call.1} parent=1 // pred_region
      %s23 = ssub.s32 512, 512
      %24 = vsyncadd [#allocation3], %s23
      %s25 = sshll.u32 [#allocation2], 4
      %s26 = int_to_ptr.vmem [resolvable:$true] %s25
      %31 = dma.hbm_to_vmem [thread:$0]  %s0, 512, %s26, [#allocation3], 128, 128, 8
    $region5: #{tpu_custom_call.1} parent=1 // pred_fallthru
      _
    // Predicated region
    $region6: #{tpu_custom_call.1} parent=1 // pred_check
      _
    $region7: #{tpu_custom_call.1} parent=1 // pred_check_branch
      %33 = sbr.rel (0) target = $region9
    $region8: #{tpu_custom_call.1} parent=1 // pred_region
      _
    $region9: #{tpu_custom_call.1} parent=1 // pred_fallthru
      _
    // Predicated region
    $region10: #{tpu_custom_call.1} parent=1 // pred_check
      _
    $region11: #{tpu_custom_call.1} parent=1 // pred_check_branch
      %35 = sbr.rel (0) target = $region13
    $region12: #{tpu_custom_call.1} parent=1 // pred_region
      _
    $region13: #{tpu_custom_call.1} parent=1 // pred_fallthru
      _
    // Predicated region
    $region14: #{tpu_custom_call.1} parent=1 // pred_check
      _
    $region15: #{tpu_custom_call.1} parent=1 // pred_check_branch
      %37 = sbr.rel (0) target = $region17
    $region16: #{tpu_custom_call.1} parent=1 // pred_region
      _
    $region17: #{tpu_custom_call.1} parent=1 // pred_fallthru
      _
    // Predicated region
    $region18: #{tpu_custom_call.1} parent=1 // pred_check
      _
    $region19: #{tpu_custom_call.1} parent=1 // pred_check_branch
      %39 = sbr.rel (0) target = $region21
    $region20: #{tpu_custom_call.1} parent=1 // pred_region
      _
    $region21: #{tpu_custom_call.1} parent=1 // pred_fallthru
      _
    // Predicated region
    $region22: #{tpu_custom_call.1} parent=1 // pred_check
      _
    $region23: #{tpu_custom_call.1} parent=1 // pred_check_branch
      %41 = sbr.rel (0) target = $region25
    $region24: #{tpu_custom_call.1} parent=1 // pred_region
      %s43 = ssub.s32 1024, 1024
      %44 = vsyncadd [#allocation6], %s43
      %s45 = sshll.u32 [#allocation5], 4
      %s46 = int_to_ptr.vmem [resolvable:$true] %s45
      %51 = dma.hbm_to_vmem [thread:$0]  %s5, 1024, %s46, [#allocation6], 128, 128, 8
    $region25: #{tpu_custom_call.1} parent=1 // pred_fallthru
      _
    // Predicated region
    $region26: #{tpu_custom_call.1} parent=1 // pred_check
      _
    $region27: #{tpu_custom_call.1} parent=1 // pred_check_branch
      %53 = sbr.rel (0) target = $region29
    $region28: #{tpu_custom_call.1} parent=1 // pred_region
      %s55 = ssub.s32 512, 512
      %56 = vsyncadd [#allocation6], %s55
      %s57 = sshll.u32 [#allocation7], 4
      %s58 = int_to_ptr.vmem [resolvable:$true] %s57
      %63 = dma.hbm_to_vmem [thread:$0]  %s6, 512, %s58, [#allocation6], 128, 128, 8
    $region29: #{tpu_custom_call.1} parent=1 // pred_fallthru
      _
    // Predicated region
    $region30: #{tpu_custom_call.1} parent=1 // pred_check
      _
    $region31: #{tpu_custom_call.1} parent=1 // pred_check_branch
      %65 = sbr.rel (0) target = $region33
    $region32: #{tpu_custom_call.1} parent=1 // pred_region
      %s67 = ssub.s32 512, 512
      %68 = vsyncadd [#allocation9], %s67
      %s69 = sshll.u32 [#allocation8], 4
      %s70 = int_to_ptr.vmem [resolvable:$true] %s69
      %75 = dma.hbm_to_vmem [thread:$0]  %s7, 512, %s70, [#allocation9], 128, 128, 8
    $region33: #{tpu_custom_call.1} parent=1 // pred_fallthru
      _
    // Predicated region
    $region34: #{tpu_custom_call.1} parent=1 // pred_check
      _
    $region35: #{tpu_custom_call.1} parent=1 // pred_check_branch
      %77 = sbr.rel (0) target = $region37
    $region36: #{tpu_custom_call.1} parent=1 // pred_region
      %s79 = ssub.s32 3072, 3072
      %80 = vsyncadd [#allocation9], %s79
      %s81 = sshll.u32 [#allocation10], 4
      %s82 = int_to_ptr.vmem [resolvable:$true] %s81
      %87 = dma.hbm_to_vmem [thread:$0]  %s8, 3072, %s82, [#allocation9], 128, 128, 8
    $region37: #{tpu_custom_call.1} parent=1 // pred_fallthru
      _
    // Predicated region
    $region38: #{tpu_custom_call.1} parent=1 // pred_check
      _
    $region39: #{tpu_custom_call.1} parent=1 // pred_check_branch
      %89 = sbr.rel (0) target = $region41
    $region40: #{tpu_custom_call.1} parent=1 // pred_region
      %s91 = ssub.s32 3072, 3072
      %92 = vsyncadd [#allocation12], %s91
      %s93 = sshll.u32 [#allocation11], 4
      %s94 = int_to_ptr.vmem [resolvable:$true] %s93
      %99 = dma.hbm_to_vmem [thread:$0]  %s9, 3072, %s94, [#allocation12], 128, 128, 8
    $region41: #{tpu_custom_call.1} parent=1 // pred_fallthru
      _
    // Predicated region
    $region42: #{tpu_custom_call.1} parent=1 // pred_check
      _
    $region43: #{tpu_custom_call.1} parent=1 // pred_check_branch
      %101 = sbr.rel (0) target = $region45
    $region44: #{tpu_custom_call.1} parent=1 // pred_region
      %102 = dma.done [#allocation3], 512
    $region45: #{tpu_custom_call.1} parent=1 // pred_fallthru
      _
    // Predicated region
    $region46: #{tpu_custom_call.1} parent=1 // pred_check
      _
    $region47: #{tpu_custom_call.1} parent=1 // pred_check_branch
      %104 = sbr.rel (0) target = $region49
    $region48: #{tpu_custom_call.1} parent=1 // pred_region
      %105 = dma.done [#allocation6], 1024
    $region49: #{tpu_custom_call.1} parent=1 // pred_fallthru
      _
    // Predicated region
    $region50: #{tpu_custom_call.1} parent=1 // pred_check
      _
    $region51: #{tpu_custom_call.1} parent=1 // pred_check_branch
      %107 = sbr.rel (0) target = $region53
    $region52: #{tpu_custom_call.1} parent=1 // pred_region
      %108 = dma.done [#allocation6], 512
    $region53: #{tpu_custom_call.1} parent=1 // pred_fallthru
      _
    // Predicated region
    $region54: #{tpu_custom_call.1} parent=1 // pred_check
      _
    $region55: #{tpu_custom_call.1} parent=1 // pred_check_branch
      %110 = sbr.rel (0) target = $region57
    $region56: #{tpu_custom_call.1} parent=1 // pred_region
      %111 = dma.done [#allocation9], 512
    $region57: #{tpu_custom_call.1} parent=1 // pred_fallthru
      _
    // Predicated region
    $region58: #{tpu_custom_call.1} parent=1 // pred_check
      _
    $region59: #{tpu_custom_call.1} parent=1 // pred_check_branch
      %113 = sbr.rel (0) target = $region61
    $region60: #{tpu_custom_call.1} parent=1 // pred_region
      %114 = dma.done [#allocation9], 3072
    $region61: #{tpu_custom_call.1} parent=1 // pred_fallthru
      _
    // Predicated region
    $region62: #{tpu_custom_call.1} parent=1 // pred_check
      _
    $region63: #{tpu_custom_call.1} parent=1 // pred_check_branch
      %116 = sbr.rel (0) target = $region65
    $region64: #{tpu_custom_call.1} parent=1 // pred_region
      %117 = dma.done [#allocation12], 3072
    $region65: #{tpu_custom_call.1} parent=1 // pred_fallthru
      _
    %v118 = vld [vmem:[#allocation2] sm:$0xff]
    %v119 = vld [vmem:[#allocation2 + $0x8] sm:$0xff]
    %v120 = vld [vmem:[#allocation2 + $0x10] sm:$0xff]
    %v121 = vld [vmem:[#allocation2 + $0x18] sm:$0xff]
    %v122 = vld [vmem:[#allocation5] sm:$0xff]
    %v123 = vld [vmem:[#allocation5 + $0x8] sm:$0xff]
    %v124 = vld [vmem:[#allocation5 + $0x10] sm:$0xff]
    %v125 = vld [vmem:[#allocation5 + $0x18] sm:$0xff]
    %v126 = vld [vmem:[#allocation5 + $0x20] sm:$0xff]
    %v127 = vld [vmem:[#allocation5 + $0x28] sm:$0xff]
    %v128 = vld [vmem:[#allocation5 + $0x30] sm:$0xff]
    %v129 = vld [vmem:[#allocation5 + $0x38] sm:$0xff]
    %v130 = vld [vmem:[#allocation7] sm:$0xff]
    %v131 = vld [vmem:[#allocation7 + $0x8] sm:$0xff]
    %v132 = vld [vmem:[#allocation7 + $0x10] sm:$0xff]
    %v133 = vld [vmem:[#allocation7 + $0x18] sm:$0xff]
    %v134 = vld [vmem:[#allocation8] sm:$0xff]
    %v135 = vld [vmem:[#allocation8 + $0x8] sm:$0xff]
    %v136 = vld [vmem:[#allocation8 + $0x10] sm:$0xff]
    %v137 = vld [vmem:[#allocation8 + $0x18] sm:$0xff]
    %v138 = vld [vmem:[%s1] sm:$0x1]
    %v139 = vld [vmem:[%s2] sm:$0x1]
    %vm140 = vcmask 523264
    %v142 = vsel %vm140, %v118, 0
    %v145 = vsel %vm140, %v119, 0
    %v148 = vsel %vm140, %v120, 0
    %v151 = vsel %vm140, %v121, 0
    %153 = vmatprep.subr.mxu0 0.0
    %154 = vmatpush1.msra.mxu0 0.0
    %155 = vmatprep.subr.mxu0 0.0
    %156 = vmatpush1.msra.mxu0 0.0
    %157 = vmatprep.subr.mxu0 0.0
    %158 = vmatpush1.msra.mxu0 0.0
    %159 = vmatprep.subr.mxu0 0.0
    %160 = vmatpush1.msra.mxu0 0.0
    %161 = vmatprep.subr.mxu0 0.0
    %162 = vmatpush1.msra.mxu0 0.0
    %163 = vmatprep.subr.mxu0 0.0
    %164 = vmatpush1.msra.mxu0 0.0
    %165 = vmatprep.subr.mxu0 0.0
    %166 = vmatpush1.msra.mxu0 0.0
    %167 = vmatprep.subr.mxu0 0.0
    %168 = vmatpush1.msra.mxu0 0.0
    %169 = vmatprep.subr.mxu0 0.0
    %170 = vmatpush1.msra.mxu0 %v129
    %171 = vmatprep.subr.mxu0 0.0
    %172 = vmatpush1.msra.mxu0 %v128
    %173 = vmatprep.subr.mxu0 0.0
    %174 = vmatpush1.msra.mxu0 %v127
    %175 = vmatprep.subr.mxu0 0.0
    %176 = vmatpush1.msra.mxu0 %v126
    %177 = vmatprep.subr.mxu0 0.0
    %178 = vmatpush1.msra.mxu0 %v125
    %179 = vmatprep.subr.mxu0 0.0
    %180 = vmatpush1.msra.mxu0 %v124
    %181 = vmatprep.subr.mxu0 0.0
    %182 = vmatpush1.msra.mxu0 %v123
    %183 = vmatprep.subr.mxu0 0.0
    %184 = vmatpush1.msra.mxu0 %v122
    %185 = vmatprep.subr.mxu0 0.0
    %186 = vmatpush2.msra.mxu0 0.0
    %187 = vmatprep.subr.mxu0 0.0
    %188 = vmatpush2.msra.mxu0 0.0
    %189 = vmatprep.subr.mxu0 0.0
    %190 = vmatpush2.msra.mxu0 0.0
    %191 = vmatprep.subr.mxu0 0.0
    %192 = vmatpush2.msra.mxu0 0.0
    %193 = vmatprep.subr.mxu0 0.0
    %194 = vmatpush2.msra.mxu0 0.0
    %195 = vmatprep.subr.mxu0 0.0
    %196 = vmatpush2.msra.mxu0 0.0
    %197 = vmatprep.subr.mxu0 0.0
    %198 = vmatpush2.msra.mxu0 0.0
    %199 = vmatprep.subr.mxu0 0.0
    %200 = vmatpush2.msra.mxu0 0.0
    %201 = vmatprep.subr.mxu0 0.0
    %202 = vmatpush2.msra.mxu0 0.0
    %203 = vmatprep.subr.mxu0 0.0
    %204 = vmatpush2.msra.mxu0 0.0
    %205 = vmatprep.subr.mxu0 0.0
    %206 = vmatpush2.msra.mxu0 0.0
    %207 = vmatprep.subr.mxu0 0.0
    %208 = vmatpush2.msra.mxu0 0.0
    %209 = vmatprep.subr.mxu0 0.0
    %210 = vmatpush2.msra.mxu0 0.0
    %211 = vmatprep.subr.mxu0 0.0
    %212 = vmatpush2.msra.mxu0 0.0
    %213 = vmatprep.subr.mxu0 0.0
    %214 = vmatpush2.msra.mxu0 0.0
    %215 = vmatprep.subr.mxu0 0.0
    %216 = vmatpush2.msra.mxu0 0.0
    %217 = vmatprep.mubr.f32.mxu0 0.0
    %218 = vmatmul.mubr.f32.gmra.mxu0 %v142
    %v219 = vpop.f32.mrf.mxu0
    %v220 = vadd.f32 0.0, %v219
    %v221 = vpop.f32.mrf.mxu0
    %222 = vmatprep.mubr.f32.mxu0 0.0
    %223 = vmatmul.mubr.f32.gmra.mxu0 %v145
    %v224 = vpop.f32.mrf.mxu0
    %v225 = vadd.f32 0.0, %v224
    %v226 = vpop.f32.mrf.mxu0
    %227 = vmatprep.mubr.f32.mxu0 0.0
    %228 = vmatmul.mubr.f32.gmra.mxu0 %v148
    %v229 = vpop.f32.mrf.mxu0
    %v230 = vadd.f32 0.0, %v229
    %v231 = vpop.f32.mrf.mxu0
    %232 = vmatprep.mubr.f32.mxu0 0.0
    %233 = vmatmul.mubr.f32.gmra.mxu0 %v151
    %v234 = vpop.f32.mrf.mxu0
    %v235 = vadd.f32 0.0, %v234
    %v236 = vpop.f32.mrf.mxu0
    %237 = vdwg.mxu0
    %v238 = vsel %vm140, %v220, 0.0
    %v239 = vsel %vm140, %v225, 0.0
    %v240 = vadd.f32 %v238, %v239
    %v241 = vsel %vm140, %v230, 0.0
    %v242 = vadd.f32 %v240, %v241
    %v243 = vsel %vm140, %v235, 0.0
    %v244 = vadd.f32 %v242, %v243
    %v245 = vrot.slane %v244, 4
    %v246 = vadd.f32 %v244, %v245
    %v247 = vrot.slane %v246, 2
    %v248 = vadd.f32 %v246, %v247
    %v249 = vrot.slane %v248, 1
    %v250 = vadd.f32 %v248, %v249
    %v251 = vmul.f32 %v250, 0.001953125
    %v252 = vsub.f32 %v118, %v251
    %v253 = vsub.f32 %v119, %v251
    %v254 = vsub.f32 %v120, %v251
    %v255 = vsub.f32 %v121, %v251
    %v256 = vmul.f32 %v252, %v252
    %v257 = vmul.f32 %v253, %v253
    %v258 = vmul.f32 %v254, %v254
    %v259 = vmul.f32 %v255, %v255
    %v261 = vsel %vm140, %v256, 0
    %v264 = vsel %vm140, %v257, 0
    %v267 = vsel %vm140, %v258, 0
    %v270 = vsel %vm140, %v259, 0
    %272 = vmatprep.subr.mxu0 0.0
    %273 = vmatpush1.msra.mxu0 0.0
    %274 = vmatprep.subr.mxu0 0.0
    %275 = vmatpush1.msra.mxu0 0.0
    %276 = vmatprep.subr.mxu0 0.0
    %277 = vmatpush1.msra.mxu0 0.0
    %278 = vmatprep.subr.mxu0 0.0
    %279 = vmatpush1.msra.mxu0 0.0
    %280 = vmatprep.subr.mxu0 0.0
    %281 = vmatpush1.msra.mxu0 0.0
    %282 = vmatprep.subr.mxu0 0.0
    %283 = vmatpush1.msra.mxu0 0.0
    %284 = vmatprep.subr.mxu0 0.0
    %285 = vmatpush1.msra.mxu0 0.0
    %286 = vmatprep.subr.mxu0 0.0
    %287 = vmatpush1.msra.mxu0 0.0
    %288 = vmatprep.subr.mxu0 0.0
    %289 = vmatpush1.msra.mxu0 %v129
    %290 = vmatprep.subr.mxu0 0.0
    %291 = vmatpush1.msra.mxu0 %v128
    %292 = vmatprep.subr.mxu0 0.0
    %293 = vmatpush1.msra.mxu0 %v127
    %294 = vmatprep.subr.mxu0 0.0
    %295 = vmatpush1.msra.mxu0 %v126
    %296 = vmatprep.subr.mxu0 0.0
    %297 = vmatpush1.msra.mxu0 %v125
    %298 = vmatprep.subr.mxu0 0.0
    %299 = vmatpush1.msra.mxu0 %v124
    %300 = vmatprep.subr.mxu0 0.0
    %301 = vmatpush1.msra.mxu0 %v123
    %302 = vmatprep.subr.mxu0 0.0
    %303 = vmatpush1.msra.mxu0 %v122
    %304 = vmatprep.subr.mxu0 0.0
    %305 = vmatpush2.msra.mxu0 0.0
    %306 = vmatprep.subr.mxu0 0.0
    %307 = vmatpush2.msra.mxu0 0.0
    %308 = vmatprep.subr.mxu0 0.0
    %309 = vmatpush2.msra.mxu0 0.0
    %310 = vmatprep.subr.mxu0 0.0
    %311 = vmatpush2.msra.mxu0 0.0
    %312 = vmatprep.subr.mxu0 0.0
    %313 = vmatpush2.msra.mxu0 0.0
    %314 = vmatprep.subr.mxu0 0.0
    %315 = vmatpush2.msra.mxu0 0.0
    %316 = vmatprep.subr.mxu0 0.0
    %317 = vmatpush2.msra.mxu0 0.0
    %318 = vmatprep.subr.mxu0 0.0
    %319 = vmatpush2.msra.mxu0 0.0
    %320 = vmatprep.subr.mxu0 0.0
    %321 = vmatpush2.msra.mxu0 0.0
    %322 = vmatprep.subr.mxu0 0.0
    %323 = vmatpush2.msra.mxu0 0.0
    %324 = vmatprep.subr.mxu0 0.0
    %325 = vmatpush2.msra.mxu0 0.0
    %326 = vmatprep.subr.mxu0 0.0
    %327 = vmatpush2.msra.mxu0 0.0
    %328 = vmatprep.subr.mxu0 0.0
    %329 = vmatpush2.msra.mxu0 0.0
    %330 = vmatprep.subr.mxu0 0.0
    %331 = vmatpush2.msra.mxu0 0.0
    %332 = vmatprep.subr.mxu0 0.0
    %333 = vmatpush2.msra.mxu0 0.0
    %334 = vmatprep.subr.mxu0 0.0
    %335 = vmatpush2.msra.mxu0 0.0
    %336 = vmatprep.mubr.f32.mxu0 0.0
    %337 = vmatmul.mubr.f32.gmra.mxu0 %v261
    %v338 = vpop.f32.mrf.mxu0
    %v339 = vadd.f32 0.0, %v338
    %v340 = vpop.f32.mrf.mxu0
    %341 = vmatprep.mubr.f32.mxu0 0.0
    %342 = vmatmul.mubr.f32.gmra.mxu0 %v264
    %v343 = vpop.f32.mrf.mxu0
    %v344 = vadd.f32 0.0, %v343
    %v345 = vpop.f32.mrf.mxu0
    %346 = vmatprep.mubr.f32.mxu0 0.0
    %347 = vmatmul.mubr.f32.gmra.mxu0 %v267
    %v348 = vpop.f32.mrf.mxu0
    %v349 = vadd.f32 0.0, %v348
    %v350 = vpop.f32.mrf.mxu0
    %351 = vmatprep.mubr.f32.mxu0 0.0
    %352 = vmatmul.mubr.f32.gmra.mxu0 %v270
    %v353 = vpop.f32.mrf.mxu0
    %v354 = vadd.f32 0.0, %v353
    %v355 = vpop.f32.mrf.mxu0
    %356 = vdwg.mxu0
    %v357 = vsel %vm140, %v339, 0.0
    %v358 = vsel %vm140, %v344, 0.0
    %v359 = vadd.f32 %v357, %v358
    %v360 = vsel %vm140, %v349, 0.0
    %v361 = vadd.f32 %v359, %v360
    %v362 = vsel %vm140, %v354, 0.0
    %v363 = vadd.f32 %v361, %v362
    %v364 = vrot.slane %v363, 4
    %v365 = vadd.f32 %v363, %v364
    %v366 = vrot.slane %v365, 2
    %v367 = vadd.f32 %v365, %v366
    %v368 = vrot.slane %v367, 1
    %v369 = vadd.f32 %v367, %v368
    %v370 = vmul.f32 %v369, 0.001953125
    %v371 = vadd.f32 %v370, 1e-05
    %v372 = vrsqrt.pop %v371
    %v373 = vmul.f32 %v138, %v372
    %v374 = vmul.f32 %v251, %v373
    %v375 = vsub.f32 %v139, %v374
    %v377 = vlaneseq
    %v378 = vshrl.u32 %v377, 7
    %v379 = vsub.s32 0, %v378
    %v380 = vrot.slane %v373, %v379
    %v382 = vmul.f32 %v118, %v380
    %v383 = vmul.f32 %v119, %v380
    %v384 = vmul.f32 %v120, %v380
    %v385 = vmul.f32 %v121, %v380
    %v387 = vlaneseq
    %v388 = vshrl.u32 %v387, 7
    %v389 = vsub.s32 0, %v388
    %v390 = vrot.slane %v375, %v389
    %v392 = vadd.f32 %v382, %v390
    %v393 = vadd.f32 %v383, %v390
    %v394 = vadd.f32 %v384, %v390
    %v395 = vadd.f32 %v385, %v390
    %v396 = vmax.f32 %v392, 0.0
    %v397 = vmax.f32 %v393, 0.0
    %v398 = vmax.f32 %v394, 0.0
    %v399 = vmax.f32 %v395, 0.0
    %v400 = vld [vmem:[#allocation10] sm:$0xff]
    %v401 = vld [vmem:[#allocation10 + $0x8] sm:$0xff]
    %v402 = vld [vmem:[#allocation10 + $0x10] sm:$0xff]
    %v403 = vld [vmem:[#allocation10 + $0x18] sm:$0xff]
    %v404 = vld [vmem:[#allocation10 + $0x20] sm:$0xff]
    %v405 = vld [vmem:[#allocation10 + $0x28] sm:$0xff]
    %v406 = vld [vmem:[#allocation10 + $0x30] sm:$0xff]
    %v407 = vld [vmem:[#allocation10 + $0x38] sm:$0xff]
    %v409 = vsel %vm140, %v396, 0
    %v412 = vsel %vm140, %v397, 0
    %v415 = vsel %vm140, %v398, 0
    %v418 = vsel %vm140, %v399, 0
    %420 = vmatprep.subr.mxu0 0.0
    %421 = vmatpush1.msra.mxu0 0.0
    %422 = vmatprep.subr.mxu0 0.0
    %423 = vmatpush1.msra.mxu0 0.0
    %424 = vmatprep.subr.mxu0 0.0
    %425 = vmatpush1.msra.mxu0 0.0
    %426 = vmatprep.subr.mxu0 0.0
    %427 = vmatpush1.msra.mxu0 0.0
    %428 = vmatprep.subr.mxu0 0.0
    %429 = vmatpush1.msra.mxu0 0.0
    %430 = vmatprep.subr.mxu0 0.0
    %431 = vmatpush1.msra.mxu0 0.0
    %432 = vmatprep.subr.mxu0 0.0
    %433 = vmatpush1.msra.mxu0 0.0
    %434 = vmatprep.subr.mxu0 0.0
    %435 = vmatpush1.msra.mxu0 0.0
    %436 = vmatprep.subr.mxu0 0.0
    %437 = vmatpush1.msra.mxu0 %v407
    %438 = vmatprep.subr.mxu0 0.0
    %439 = vmatpush1.msra.mxu0 %v406
    %440 = vmatprep.subr.mxu0 0.0
    %441 = vmatpush1.msra.mxu0 %v405
    %442 = vmatprep.subr.mxu0 0.0
    %443 = vmatpush1.msra.mxu0 %v404
    %444 = vmatprep.subr.mxu0 0.0
    %445 = vmatpush1.msra.mxu0 %v403
    %446 = vmatprep.subr.mxu0 0.0
    %447 = vmatpush1.msra.mxu0 %v402
    %448 = vmatprep.subr.mxu0 0.0
    %449 = vmatpush1.msra.mxu0 %v401
    %450 = vmatprep.subr.mxu0 0.0
    %451 = vmatpush1.msra.mxu0 %v400
    %452 = vmatprep.subr.mxu0 0.0
    %453 = vmatpush2.msra.mxu0 0.0
    %454 = vmatprep.subr.mxu0 0.0
    %455 = vmatpush2.msra.mxu0 0.0
    %456 = vmatprep.subr.mxu0 0.0
    %457 = vmatpush2.msra.mxu0 0.0
    %458 = vmatprep.subr.mxu0 0.0
    %459 = vmatpush2.msra.mxu0 0.0
    %460 = vmatprep.subr.mxu0 0.0
    %461 = vmatpush2.msra.mxu0 0.0
    %462 = vmatprep.subr.mxu0 0.0
    %463 = vmatpush2.msra.mxu0 0.0
    %464 = vmatprep.subr.mxu0 0.0
    %465 = vmatpush2.msra.mxu0 0.0
    %466 = vmatprep.subr.mxu0 0.0
    %467 = vmatpush2.msra.mxu0 0.0
    %468 = vmatprep.subr.mxu0 0.0
    %469 = vmatpush2.msra.mxu0 0.0
    %470 = vmatprep.subr.mxu0 0.0
    %471 = vmatpush2.msra.mxu0 0.0
    %472 = vmatprep.subr.mxu0 0.0
    %473 = vmatpush2.msra.mxu0 0.0
    %474 = vmatprep.subr.mxu0 0.0
    %475 = vmatpush2.msra.mxu0 0.0
    %476 = vmatprep.subr.mxu0 0.0
    %477 = vmatpush2.msra.mxu0 0.0
    %478 = vmatprep.subr.mxu0 0.0
    %479 = vmatpush2.msra.mxu0 0.0
    %480 = vmatprep.subr.mxu0 0.0
    %481 = vmatpush2.msra.mxu0 0.0
    %482 = vmatprep.subr.mxu0 0.0
    %483 = vmatpush2.msra.mxu0 0.0
    %484 = vmatprep.mubr.f32.mxu0 0.0
    %485 = vmatmul.mubr.f32.gmra.mxu0 %v409
    %v486 = vpop.f32.mrf.mxu0
    %v487 = vadd.f32 0.0, %v486
    %v488 = vpop.f32.mrf.mxu0
    %489 = vmatprep.mubr.f32.mxu0 0.0
    %490 = vmatmul.mubr.f32.gmra.mxu0 %v412
    %v491 = vpop.f32.mrf.mxu0
    %v492 = vadd.f32 0.0, %v491
    %v493 = vpop.f32.mrf.mxu0
    %494 = vmatprep.mubr.f32.mxu0 0.0
    %495 = vmatmul.mubr.f32.gmra.mxu0 %v415
    %v496 = vpop.f32.mrf.mxu0
    %v497 = vadd.f32 0.0, %v496
    %v498 = vpop.f32.mrf.mxu0
    %499 = vmatprep.mubr.f32.mxu0 0.0
    %500 = vmatmul.mubr.f32.gmra.mxu0 %v418
    %v501 = vpop.f32.mrf.mxu0
    %v502 = vadd.f32 0.0, %v501
    %v503 = vpop.f32.mrf.mxu0
    %504 = vdwg.mxu0
    %s505 = scalar_lea.vmem [#allocation10], 64
    %v506 = vld [vmem:[%s505] sm:$0xff]
    %v507 = vld [vmem:[%s505 + $0x8] sm:$0xff]
    %v508 = vld [vmem:[%s505 + $0x10] sm:$0xff]
    %v509 = vld [vmem:[%s505 + $0x18] sm:$0xff]
    %v510 = vld [vmem:[%s505 + $0x20] sm:$0xff]
    %v511 = vld [vmem:[%s505 + $0x28] sm:$0xff]
    %v512 = vld [vmem:[%s505 + $0x30] sm:$0xff]
    %v513 = vld [vmem:[%s505 + $0x38] sm:$0xff]
    %514 = vmatprep.subr.mxu0 0.0
    %515 = vmatpush1.msra.mxu0 0.0
    %516 = vmatprep.subr.mxu0 0.0
    %517 = vmatpush1.msra.mxu0 0.0
    %518 = vmatprep.subr.mxu0 0.0
    %519 = vmatpush1.msra.mxu0 0.0
    %520 = vmatprep.subr.mxu0 0.0
    %521 = vmatpush1.msra.mxu0 0.0
    %522 = vmatprep.subr.mxu0 0.0
    %523 = vmatpush1.msra.mxu0 0.0
    %524 = vmatprep.subr.mxu0 0.0
    %525 = vmatpush1.msra.mxu0 0.0
    %526 = vmatprep.subr.mxu0 0.0
    %527 = vmatpush1.msra.mxu0 0.0
    %528 = vmatprep.subr.mxu0 0.0
    %529 = vmatpush1.msra.mxu0 0.0
    %530 = vmatprep.subr.mxu0 0.0
    %531 = vmatpush1.msra.mxu0 %v513
    %532 = vmatprep.subr.mxu0 0.0
    %533 = vmatpush1.msra.mxu0 %v512
    %534 = vmatprep.subr.mxu0 0.0
    %535 = vmatpush1.msra.mxu0 %v511
    %536 = vmatprep.subr.mxu0 0.0
    %537 = vmatpush1.msra.mxu0 %v510
    %538 = vmatprep.subr.mxu0 0.0
    %539 = vmatpush1.msra.mxu0 %v509
    %540 = vmatprep.subr.mxu0 0.0
    %541 = vmatpush1.msra.mxu0 %v508
    %542 = vmatprep.subr.mxu0 0.0
    %543 = vmatpush1.msra.mxu0 %v507
    %544 = vmatprep.subr.mxu0 0.0
    %545 = vmatpush1.msra.mxu0 %v506
    %546 = vmatprep.subr.mxu0 0.0
    %547 = vmatpush2.msra.mxu0 0.0
    %548 = vmatprep.subr.mxu0 0.0
    %549 = vmatpush2.msra.mxu0 0.0
    %550 = vmatprep.subr.mxu0 0.0
    %551 = vmatpush2.msra.mxu0 0.0
    %552 = vmatprep.subr.mxu0 0.0
    %553 = vmatpush2.msra.mxu0 0.0
    %554 = vmatprep.subr.mxu0 0.0
    %555 = vmatpush2.msra.mxu0 0.0
    %556 = vmatprep.subr.mxu0 0.0
    %557 = vmatpush2.msra.mxu0 0.0
    %558 = vmatprep.subr.mxu0 0.0
    %559 = vmatpush2.msra.mxu0 0.0
    %560 = vmatprep.subr.mxu0 0.0
    %561 = vmatpush2.msra.mxu0 0.0
    %562 = vmatprep.subr.mxu0 0.0
    %563 = vmatpush2.msra.mxu0 0.0
    %564 = vmatprep.subr.mxu0 0.0
    %565 = vmatpush2.msra.mxu0 0.0
    %566 = vmatprep.subr.mxu0 0.0
    %567 = vmatpush2.msra.mxu0 0.0
    %568 = vmatprep.subr.mxu0 0.0
    %569 = vmatpush2.msra.mxu0 0.0
    %570 = vmatprep.subr.mxu0 0.0
    %571 = vmatpush2.msra.mxu0 0.0
    %572 = vmatprep.subr.mxu0 0.0
    %573 = vmatpush2.msra.mxu0 0.0
    %574 = vmatprep.subr.mxu0 0.0
    %575 = vmatpush2.msra.mxu0 0.0
    %576 = vmatprep.subr.mxu0 0.0
    %577 = vmatpush2.msra.mxu0 0.0
    %578 = vmatprep.mubr.f32.mxu0 0.0
    %579 = vmatmul.mubr.f32.gmra.mxu0 %v409
    %v580 = vpop.f32.mrf.mxu0
    %v581 = vadd.f32 0.0, %v580
    %v582 = vpop.f32.mrf.mxu0
    %583 = vmatprep.mubr.f32.mxu0 0.0
    %584 = vmatmul.mubr.f32.gmra.mxu0 %v412
    %v585 = vpop.f32.mrf.mxu0
    %v586 = vadd.f32 0.0, %v585
    %v587 = vpop.f32.mrf.mxu0
    %588 = vmatprep.mubr.f32.mxu0 0.0
    %589 = vmatmul.mubr.f32.gmra.mxu0 %v415
    %v590 = vpop.f32.mrf.mxu0
    %v591 = vadd.f32 0.0, %v590
    %v592 = vpop.f32.mrf.mxu0
    %593 = vmatprep.mubr.f32.mxu0 0.0
    %594 = vmatmul.mubr.f32.gmra.mxu0 %v418
    %v595 = vpop.f32.mrf.mxu0
    %v596 = vadd.f32 0.0, %v595
    %v597 = vpop.f32.mrf.mxu0
    %598 = vdwg.mxu0
    %s599 = scalar_lea.vmem [#allocation10], 128
    %v600 = vld [vmem:[%s599] sm:$0xff]
    %v601 = vld [vmem:[%s599 + $0x8] sm:$0xff]
    %v602 = vld [vmem:[%s599 + $0x10] sm:$0xff]
    %v603 = vld [vmem:[%s599 + $0x18] sm:$0xff]
    %v604 = vld [vmem:[%s599 + $0x20] sm:$0xff]
    %v605 = vld [vmem:[%s599 + $0x28] sm:$0xff]
    %v606 = vld [vmem:[%s599 + $0x30] sm:$0xff]
    %v607 = vld [vmem:[%s599 + $0x38] sm:$0xff]
    %608 = vmatprep.subr.mxu0 0.0
    %609 = vmatpush1.msra.mxu0 0.0
    %610 = vmatprep.subr.mxu0 0.0
    %611 = vmatpush1.msra.mxu0 0.0
    %612 = vmatprep.subr.mxu0 0.0
    %613 = vmatpush1.msra.mxu0 0.0
    %614 = vmatprep.subr.mxu0 0.0
    %615 = vmatpush1.msra.mxu0 0.0
    %616 = vmatprep.subr.mxu0 0.0
    %617 = vmatpush1.msra.mxu0 0.0
    %618 = vmatprep.subr.mxu0 0.0
    %619 = vmatpush1.msra.mxu0 0.0
    %620 = vmatprep.subr.mxu0 0.0
    %621 = vmatpush1.msra.mxu0 0.0
    %622 = vmatprep.subr.mxu0 0.0
    %623 = vmatpush1.msra.mxu0 0.0
    %624 = vmatprep.subr.mxu0 0.0
    %625 = vmatpush1.msra.mxu0 %v607
    %626 = vmatprep.subr.mxu0 0.0
    %627 = vmatpush1.msra.mxu0 %v606
    %628 = vmatprep.subr.mxu0 0.0
    %629 = vmatpush1.msra.mxu0 %v605
    %630 = vmatprep.subr.mxu0 0.0
    %631 = vmatpush1.msra.mxu0 %v604
    %632 = vmatprep.subr.mxu0 0.0
    %633 = vmatpush1.msra.mxu0 %v603
    %634 = vmatprep.subr.mxu0 0.0
    %635 = vmatpush1.msra.mxu0 %v602
    %636 = vmatprep.subr.mxu0 0.0
    %637 = vmatpush1.msra.mxu0 %v601
    %638 = vmatprep.subr.mxu0 0.0
    %639 = vmatpush1.msra.mxu0 %v600
    %640 = vmatprep.subr.mxu0 0.0
    %641 = vmatpush2.msra.mxu0 0.0
    %642 = vmatprep.subr.mxu0 0.0
    %643 = vmatpush2.msra.mxu0 0.0
    %644 = vmatprep.subr.mxu0 0.0
    %645 = vmatpush2.msra.mxu0 0.0
    %646 = vmatprep.subr.mxu0 0.0
    %647 = vmatpush2.msra.mxu0 0.0
    %648 = vmatprep.subr.mxu0 0.0
    %649 = vmatpush2.msra.mxu0 0.0
    %650 = vmatprep.subr.mxu0 0.0
    %651 = vmatpush2.msra.mxu0 0.0
    %652 = vmatprep.subr.mxu0 0.0
    %653 = vmatpush2.msra.mxu0 0.0
    %654 = vmatprep.subr.mxu0 0.0
    %655 = vmatpush2.msra.mxu0 0.0
    %656 = vmatprep.subr.mxu0 0.0
    %657 = vmatpush2.msra.mxu0 0.0
    %658 = vmatprep.subr.mxu0 0.0
    %659 = vmatpush2.msra.mxu0 0.0
    %660 = vmatprep.subr.mxu0 0.0
    %661 = vmatpush2.msra.mxu0 0.0
    %662 = vmatprep.subr.mxu0 0.0
    %663 = vmatpush2.msra.mxu0 0.0
    %664 = vmatprep.subr.mxu0 0.0
    %665 = vmatpush2.msra.mxu0 0.0
    %666 = vmatprep.subr.mxu0 0.0
    %667 = vmatpush2.msra.mxu0 0.0
    %668 = vmatprep.subr.mxu0 0.0
    %669 = vmatpush2.msra.mxu0 0.0
    %670 = vmatprep.subr.mxu0 0.0
    %671 = vmatpush2.msra.mxu0 0.0
    %672 = vmatprep.mubr.f32.mxu0 0.0
    %673 = vmatmul.mubr.f32.gmra.mxu0 %v409
    %v674 = vpop.f32.mrf.mxu0
    %v675 = vadd.f32 0.0, %v674
    %v676 = vpop.f32.mrf.mxu0
    %677 = vmatprep.mubr.f32.mxu0 0.0
    %678 = vmatmul.mubr.f32.gmra.mxu0 %v412
    %v679 = vpop.f32.mrf.mxu0
    %v680 = vadd.f32 0.0, %v679
    %v681 = vpop.f32.mrf.mxu0
    %682 = vmatprep.mubr.f32.mxu0 0.0
    %683 = vmatmul.mubr.f32.gmra.mxu0 %v415
    %v684 = vpop.f32.mrf.mxu0
    %v685 = vadd.f32 0.0, %v684
    %v686 = vpop.f32.mrf.mxu0
    %687 = vmatprep.mubr.f32.mxu0 0.0
    %688 = vmatmul.mubr.f32.gmra.mxu0 %v418
    %v689 = vpop.f32.mrf.mxu0
    %v690 = vadd.f32 0.0, %v689
    %v691 = vpop.f32.mrf.mxu0
    %692 = vdwg.mxu0
    %vm693 = vcmask 261120
    %v695 = vsel %vm693, %v130, 0
    %v698 = vsel %vm693, %v131, 0
    %v701 = vsel %vm693, %v132, 0
    %v704 = vsel %vm693, %v133, 0
    %706 = vmatprep.subr.mxu0 0.0
    %707 = vmatpush1.msra.mxu0 0.0
    %708 = vmatprep.subr.mxu0 0.0
    %709 = vmatpush1.msra.mxu0 0.0
    %710 = vmatprep.subr.mxu0 0.0
    %711 = vmatpush1.msra.mxu0 0.0
    %712 = vmatprep.subr.mxu0 0.0
    %713 = vmatpush1.msra.mxu0 0.0
    %714 = vmatprep.subr.mxu0 0.0
    %715 = vmatpush1.msra.mxu0 0.0
    %716 = vmatprep.subr.mxu0 0.0
    %717 = vmatpush1.msra.mxu0 0.0
    %718 = vmatprep.subr.mxu0 0.0
    %719 = vmatpush1.msra.mxu0 0.0
    %720 = vmatprep.subr.mxu0 0.0
    %721 = vmatpush1.msra.mxu0 0.0
    %722 = vmatprep.subr.mxu0 0.0
    %723 = vmatpush1.msra.mxu0 0.0
    %724 = vmatprep.subr.mxu0 0.0
    %725 = vmatpush1.msra.mxu0 0.0
    %726 = vmatprep.subr.mxu0 0.0
    %727 = vmatpush1.msra.mxu0 0.0
    %728 = vmatprep.subr.mxu0 0.0
    %729 = vmatpush1.msra.mxu0 0.0
    %730 = vmatprep.subr.mxu0 0.0
    %731 = vmatpush1.msra.mxu0 %v502
    %732 = vmatprep.subr.mxu0 0.0
    %733 = vmatpush1.msra.mxu0 %v497
    %734 = vmatprep.subr.mxu0 0.0
    %735 = vmatpush1.msra.mxu0 %v492
    %736 = vmatprep.subr.mxu0 0.0
    %737 = vmatpush1.msra.mxu0 %v487
    %738 = vmatprep.subr.mxu0 0.0
    %739 = vmatpush2.msra.mxu0 0.0
    %740 = vmatprep.subr.mxu0 0.0
    %741 = vmatpush2.msra.mxu0 0.0
    %742 = vmatprep.subr.mxu0 0.0
    %743 = vmatpush2.msra.mxu0 0.0
    %744 = vmatprep.subr.mxu0 0.0
    %745 = vmatpush2.msra.mxu0 0.0
    %746 = vmatprep.subr.mxu0 0.0
    %747 = vmatpush2.msra.mxu0 0.0
    %748 = vmatprep.subr.mxu0 0.0
    %749 = vmatpush2.msra.mxu0 0.0
    %750 = vmatprep.subr.mxu0 0.0
    %751 = vmatpush2.msra.mxu0 0.0
    %752 = vmatprep.subr.mxu0 0.0
    %753 = vmatpush2.msra.mxu0 0.0
    %754 = vmatprep.subr.mxu0 0.0
    %755 = vmatpush2.msra.mxu0 0.0
    %756 = vmatprep.subr.mxu0 0.0
    %757 = vmatpush2.msra.mxu0 0.0
    %758 = vmatprep.subr.mxu0 0.0
    %759 = vmatpush2.msra.mxu0 0.0
    %760 = vmatprep.subr.mxu0 0.0
    %761 = vmatpush2.msra.mxu0 0.0
    %762 = vmatprep.subr.mxu0 0.0
    %763 = vmatpush2.msra.mxu0 0.0
    %764 = vmatprep.subr.mxu0 0.0
    %765 = vmatpush2.msra.mxu0 0.0
    %766 = vmatprep.subr.mxu0 0.0
    %767 = vmatpush2.msra.mxu0 0.0
    %768 = vmatprep.subr.mxu0 0.0
    %769 = vmatpush2.msra.mxu0 0.0
    %770 = vmatprep.mubr.f32.mxu0 0.0
    %771 = vmatmul.mubr.f32.gmra.mxu0 %v695
    %v772 = vpop.f32.mrf.mxu0
    %v773 = vadd.f32 %v581, %v772
    %v774 = vpop.f32.mrf.mxu0
    %775 = vmatprep.mubr.f32.mxu0 0.0
    %776 = vmatmul.mubr.f32.gmra.mxu0 %v698
    %v777 = vpop.f32.mrf.mxu0
    %v778 = vadd.f32 %v586, %v777
    %v779 = vpop.f32.mrf.mxu0
    %780 = vmatprep.mubr.f32.mxu0 0.0
    %781 = vmatmul.mubr.f32.gmra.mxu0 %v701
    %v782 = vpop.f32.mrf.mxu0
    %v783 = vadd.f32 %v591, %v782
    %v784 = vpop.f32.mrf.mxu0
    %785 = vmatprep.mubr.f32.mxu0 0.0
    %786 = vmatmul.mubr.f32.gmra.mxu0 %v704
    %v787 = vpop.f32.mrf.mxu0
    %v788 = vadd.f32 %v596, %v787
    %v789 = vpop.f32.mrf.mxu0
    %790 = vdwg.mxu0
    %v792 = vsel %vm693, %v134, 0
    %v795 = vsel %vm693, %v135, 0
    %v798 = vsel %vm693, %v136, 0
    %v801 = vsel %vm693, %v137, 0
    %803 = vmatprep.subr.mxu0 0.0
    %804 = vmatpush1.msra.mxu0 0.0
    %805 = vmatprep.subr.mxu0 0.0
    %806 = vmatpush1.msra.mxu0 0.0
    %807 = vmatprep.subr.mxu0 0.0
    %808 = vmatpush1.msra.mxu0 0.0
    %809 = vmatprep.subr.mxu0 0.0
    %810 = vmatpush1.msra.mxu0 0.0
    %811 = vmatprep.subr.mxu0 0.0
    %812 = vmatpush1.msra.mxu0 0.0
    %813 = vmatprep.subr.mxu0 0.0
    %814 = vmatpush1.msra.mxu0 0.0
    %815 = vmatprep.subr.mxu0 0.0
    %816 = vmatpush1.msra.mxu0 0.0
    %817 = vmatprep.subr.mxu0 0.0
    %818 = vmatpush1.msra.mxu0 0.0
    %819 = vmatprep.subr.mxu0 0.0
    %820 = vmatpush1.msra.mxu0 0.0
    %821 = vmatprep.subr.mxu0 0.0
    %822 = vmatpush1.msra.mxu0 0.0
    %823 = vmatprep.subr.mxu0 0.0
    %824 = vmatpush1.msra.mxu0 0.0
    %825 = vmatprep.subr.mxu0 0.0
    %826 = vmatpush1.msra.mxu0 0.0
    %827 = vmatprep.subr.mxu0 0.0
    %828 = vmatpush1.msra.mxu0 %v690
    %829 = vmatprep.subr.mxu0 0.0
    %830 = vmatpush1.msra.mxu0 %v685
    %831 = vmatprep.subr.mxu0 0.0
    %832 = vmatpush1.msra.mxu0 %v680
    %833 = vmatprep.subr.mxu0 0.0
    %834 = vmatpush1.msra.mxu0 %v675
    %835 = vmatprep.subr.mxu0 0.0
    %836 = vmatpush2.msra.mxu0 0.0
    %837 = vmatprep.subr.mxu0 0.0
    %838 = vmatpush2.msra.mxu0 0.0
    %839 = vmatprep.subr.mxu0 0.0
    %840 = vmatpush2.msra.mxu0 0.0
    %841 = vmatprep.subr.mxu0 0.0
    %842 = vmatpush2.msra.mxu0 0.0
    %843 = vmatprep.subr.mxu0 0.0
    %844 = vmatpush2.msra.mxu0 0.0
    %845 = vmatprep.subr.mxu0 0.0
    %846 = vmatpush2.msra.mxu0 0.0
    %847 = vmatprep.subr.mxu0 0.0
    %848 = vmatpush2.msra.mxu0 0.0
    %849 = vmatprep.subr.mxu0 0.0
    %850 = vmatpush2.msra.mxu0 0.0
    %851 = vmatprep.subr.mxu0 0.0
    %852 = vmatpush2.msra.mxu0 0.0
    %853 = vmatprep.subr.mxu0 0.0
    %854 = vmatpush2.msra.mxu0 0.0
    %855 = vmatprep.subr.mxu0 0.0
    %856 = vmatpush2.msra.mxu0 0.0
    %857 = vmatprep.subr.mxu0 0.0
    %858 = vmatpush2.msra.mxu0 0.0
    %859 = vmatprep.subr.mxu0 0.0
    %860 = vmatpush2.msra.mxu0 0.0
    %861 = vmatprep.subr.mxu0 0.0
    %862 = vmatpush2.msra.mxu0 0.0
    %863 = vmatprep.subr.mxu0 0.0
    %864 = vmatpush2.msra.mxu0 0.0
    %865 = vmatprep.subr.mxu0 0.0
    %866 = vmatpush2.msra.mxu0 0.0
    %867 = vmatprep.mubr.f32.mxu0 0.0
    %868 = vmatmul.mubr.f32.gmra.mxu0 %v792
    %v869 = vpop.f32.mrf.mxu0
    %v870 = vadd.f32 0.0, %v869
    %v871 = vpop.f32.mrf.mxu0
    %872 = vmatprep.mubr.f32.mxu0 0.0
    %873 = vmatmul.mubr.f32.gmra.mxu0 %v795
    %v874 = vpop.f32.mrf.mxu0
    %v875 = vadd.f32 0.0, %v874
    %v876 = vpop.f32.mrf.mxu0
    %877 = vmatprep.mubr.f32.mxu0 0.0
    %878 = vmatmul.mubr.f32.gmra.mxu0 %v798
    %v879 = vpop.f32.mrf.mxu0
    %v880 = vadd.f32 0.0, %v879
    %v881 = vpop.f32.mrf.mxu0
    %882 = vmatprep.mubr.f32.mxu0 0.0
    %883 = vmatmul.mubr.f32.gmra.mxu0 %v801
    %v884 = vpop.f32.mrf.mxu0
    %v885 = vadd.f32 0.0, %v884
    %v886 = vpop.f32.mrf.mxu0
    %887 = vdwg.mxu0
    %v888 = vadd.f32 %v773, %v870
    %v889 = vadd.f32 %v778, %v875
    %v890 = vadd.f32 %v783, %v880
    %v891 = vadd.f32 %v788, %v885
    %v892 = vld [vmem:[%s3] sm:$0x1]
    %v893 = vld [vmem:[%s4] sm:$0x1]
    %v895 = vsel %vm140, %v888, 0
    %v898 = vsel %vm140, %v889, 0
    %v901 = vsel %vm140, %v890, 0
    %v904 = vsel %vm140, %v891, 0
    %906 = vmatprep.subr.mxu0 0.0
    %907 = vmatpush1.msra.mxu0 0.0
    %908 = vmatprep.subr.mxu0 0.0
    %909 = vmatpush1.msra.mxu0 0.0
    %910 = vmatprep.subr.mxu0 0.0
    %911 = vmatpush1.msra.mxu0 0.0
    %912 = vmatprep.subr.mxu0 0.0
    %913 = vmatpush1.msra.mxu0 0.0
    %914 = vmatprep.subr.mxu0 0.0
    %915 = vmatpush1.msra.mxu0 0.0
    %916 = vmatprep.subr.mxu0 0.0
    %917 = vmatpush1.msra.mxu0 0.0
    %918 = vmatprep.subr.mxu0 0.0
    %919 = vmatpush1.msra.mxu0 0.0
    %920 = vmatprep.subr.mxu0 0.0
    %921 = vmatpush1.msra.mxu0 0.0
    %922 = vmatprep.subr.mxu0 0.0
    %923 = vmatpush1.msra.mxu0 %v129
    %924 = vmatprep.subr.mxu0 0.0
    %925 = vmatpush1.msra.mxu0 %v128
    %926 = vmatprep.subr.mxu0 0.0
    %927 = vmatpush1.msra.mxu0 %v127
    %928 = vmatprep.subr.mxu0 0.0
    %929 = vmatpush1.msra.mxu0 %v126
    %930 = vmatprep.subr.mxu0 0.0
    %931 = vmatpush1.msra.mxu0 %v125
    %932 = vmatprep.subr.mxu0 0.0
    %933 = vmatpush1.msra.mxu0 %v124
    %934 = vmatprep.subr.mxu0 0.0
    %935 = vmatpush1.msra.mxu0 %v123
    %936 = vmatprep.subr.mxu0 0.0
    %937 = vmatpush1.msra.mxu0 %v122
    %938 = vmatprep.subr.mxu0 0.0
    %939 = vmatpush2.msra.mxu0 0.0
    %940 = vmatprep.subr.mxu0 0.0
    %941 = vmatpush2.msra.mxu0 0.0
    %942 = vmatprep.subr.mxu0 0.0
    %943 = vmatpush2.msra.mxu0 0.0
    %944 = vmatprep.subr.mxu0 0.0
    %945 = vmatpush2.msra.mxu0 0.0
    %946 = vmatprep.subr.mxu0 0.0
    %947 = vmatpush2.msra.mxu0 0.0
    %948 = vmatprep.subr.mxu0 0.0
    %949 = vmatpush2.msra.mxu0 0.0
    %950 = vmatprep.subr.mxu0 0.0
    %951 = vmatpush2.msra.mxu0 0.0
    %952 = vmatprep.subr.mxu0 0.0
    %953 = vmatpush2.msra.mxu0 0.0
    %954 = vmatprep.subr.mxu0 0.0
    %955 = vmatpush2.msra.mxu0 0.0
    %956 = vmatprep.subr.mxu0 0.0
    %957 = vmatpush2.msra.mxu0 0.0
    %958 = vmatprep.subr.mxu0 0.0
    %959 = vmatpush2.msra.mxu0 0.0
    %960 = vmatprep.subr.mxu0 0.0
    %961 = vmatpush2.msra.mxu0 0.0
    %962 = vmatprep.subr.mxu0 0.0
    %963 = vmatpush2.msra.mxu0 0.0
    %964 = vmatprep.subr.mxu0 0.0
    %965 = vmatpush2.msra.mxu0 0.0
    %966 = vmatprep.subr.mxu0 0.0
    %967 = vmatpush2.msra.mxu0 0.0
    %968 = vmatprep.subr.mxu0 0.0
    %969 = vmatpush2.msra.mxu0 0.0
    %970 = vmatprep.mubr.f32.mxu0 0.0
    %971 = vmatmul.mubr.f32.gmra.mxu0 %v895
    %v972 = vpop.f32.mrf.mxu0
    %v973 = vadd.f32 0.0, %v972
    %v974 = vpop.f32.mrf.mxu0
    %975 = vmatprep.mubr.f32.mxu0 0.0
    %976 = vmatmul.mubr.f32.gmra.mxu0 %v898
    %v977 = vpop.f32.mrf.mxu0
    %v978 = vadd.f32 0.0, %v977
    %v979 = vpop.f32.mrf.mxu0
    %980 = vmatprep.mubr.f32.mxu0 0.0
    %981 = vmatmul.mubr.f32.gmra.mxu0 %v901
    %v982 = vpop.f32.mrf.mxu0
    %v983 = vadd.f32 0.0, %v982
    %v984 = vpop.f32.mrf.mxu0
    %985 = vmatprep.mubr.f32.mxu0 0.0
    %986 = vmatmul.mubr.f32.gmra.mxu0 %v904
    %v987 = vpop.f32.mrf.mxu0
    %v988 = vadd.f32 0.0, %v987
    %v989 = vpop.f32.mrf.mxu0
    %990 = vdwg.mxu0
    %v991 = vsel %vm140, %v973, 0.0
    %v992 = vsel %vm140, %v978, 0.0
    %v993 = vadd.f32 %v991, %v992
    %v994 = vsel %vm140, %v983, 0.0
    %v995 = vadd.f32 %v993, %v994
    %v996 = vsel %vm140, %v988, 0.0
    %v997 = vadd.f32 %v995, %v996
    %v998 = vrot.slane %v997, 4
    %v999 = vadd.f32 %v997, %v998
    %v1000 = vrot.slane %v999, 2
    %v1001 = vadd.f32 %v999, %v1000
    %v1002 = vrot.slane %v1001, 1
    %v1003 = vadd.f32 %v1001, %v1002
    %v1004 = vmul.f32 %v1003, 0.001953125
    %v1005 = vsub.f32 %v888, %v1004
    %v1006 = vsub.f32 %v889, %v1004
    %v1007 = vsub.f32 %v890, %v1004
    %v1008 = vsub.f32 %v891, %v1004
    %v1009 = vmul.f32 %v1005, %v1005
    %v1010 = vmul.f32 %v1006, %v1006
    %v1011 = vmul.f32 %v1007, %v1007
    %v1012 = vmul.f32 %v1008, %v1008
    %v1014 = vsel %vm140, %v1009, 0
    %v1017 = vsel %vm140, %v1010, 0
    %v1020 = vsel %vm140, %v1011, 0
    %v1023 = vsel %vm140, %v1012, 0
    %1025 = vmatprep.subr.mxu0 0.0
    %1026 = vmatpush1.msra.mxu0 0.0
    %1027 = vmatprep.subr.mxu0 0.0
    %1028 = vmatpush1.msra.mxu0 0.0
    %1029 = vmatprep.subr.mxu0 0.0
    %1030 = vmatpush1.msra.mxu0 0.0
    %1031 = vmatprep.subr.mxu0 0.0
    %1032 = vmatpush1.msra.mxu0 0.0
    %1033 = vmatprep.subr.mxu0 0.0
    %1034 = vmatpush1.msra.mxu0 0.0
    %1035 = vmatprep.subr.mxu0 0.0
    %1036 = vmatpush1.msra.mxu0 0.0
    %1037 = vmatprep.subr.mxu0 0.0
    %1038 = vmatpush1.msra.mxu0 0.0
    %1039 = vmatprep.subr.mxu0 0.0
    %1040 = vmatpush1.msra.mxu0 0.0
    %1041 = vmatprep.subr.mxu0 0.0
    %1042 = vmatpush1.msra.mxu0 %v129
    %1043 = vmatprep.subr.mxu0 0.0
    %1044 = vmatpush1.msra.mxu0 %v128
    %1045 = vmatprep.subr.mxu0 0.0
    %1046 = vmatpush1.msra.mxu0 %v127
    %1047 = vmatprep.subr.mxu0 0.0
    %1048 = vmatpush1.msra.mxu0 %v126
    %1049 = vmatprep.subr.mxu0 0.0
    %1050 = vmatpush1.msra.mxu0 %v125
    %1051 = vmatprep.subr.mxu0 0.0
    %1052 = vmatpush1.msra.mxu0 %v124
    %1053 = vmatprep.subr.mxu0 0.0
    %1054 = vmatpush1.msra.mxu0 %v123
    %1055 = vmatprep.subr.mxu0 0.0
    %1056 = vmatpush1.msra.mxu0 %v122
    %1057 = vmatprep.subr.mxu0 0.0
    %1058 = vmatpush2.msra.mxu0 0.0
    %1059 = vmatprep.subr.mxu0 0.0
    %1060 = vmatpush2.msra.mxu0 0.0
    %1061 = vmatprep.subr.mxu0 0.0
    %1062 = vmatpush2.msra.mxu0 0.0
    %1063 = vmatprep.subr.mxu0 0.0
    %1064 = vmatpush2.msra.mxu0 0.0
    %1065 = vmatprep.subr.mxu0 0.0
    %1066 = vmatpush2.msra.mxu0 0.0
    %1067 = vmatprep.subr.mxu0 0.0
    %1068 = vmatpush2.msra.mxu0 0.0
    %1069 = vmatprep.subr.mxu0 0.0
    %1070 = vmatpush2.msra.mxu0 0.0
    %1071 = vmatprep.subr.mxu0 0.0
    %1072 = vmatpush2.msra.mxu0 0.0
    %1073 = vmatprep.subr.mxu0 0.0
    %1074 = vmatpush2.msra.mxu0 0.0
    %1075 = vmatprep.subr.mxu0 0.0
    %1076 = vmatpush2.msra.mxu0 0.0
    %1077 = vmatprep.subr.mxu0 0.0
    %1078 = vmatpush2.msra.mxu0 0.0
    %1079 = vmatprep.subr.mxu0 0.0
    %1080 = vmatpush2.msra.mxu0 0.0
    %1081 = vmatprep.subr.mxu0 0.0
    %1082 = vmatpush2.msra.mxu0 0.0
    %1083 = vmatprep.subr.mxu0 0.0
    %1084 = vmatpush2.msra.mxu0 0.0
    %1085 = vmatprep.subr.mxu0 0.0
    %1086 = vmatpush2.msra.mxu0 0.0
    %1087 = vmatprep.subr.mxu0 0.0
    %1088 = vmatpush2.msra.mxu0 0.0
    %1089 = vmatprep.mubr.f32.mxu0 0.0
    %1090 = vmatmul.mubr.f32.gmra.mxu0 %v1014
    %v1091 = vpop.f32.mrf.mxu0
    %v1092 = vadd.f32 0.0, %v1091
    %v1093 = vpop.f32.mrf.mxu0
    %1094 = vmatprep.mubr.f32.mxu0 0.0
    %1095 = vmatmul.mubr.f32.gmra.mxu0 %v1017
    %v1096 = vpop.f32.mrf.mxu0
    %v1097 = vadd.f32 0.0, %v1096
    %v1098 = vpop.f32.mrf.mxu0
    %1099 = vmatprep.mubr.f32.mxu0 0.0
    %1100 = vmatmul.mubr.f32.gmra.mxu0 %v1020
    %v1101 = vpop.f32.mrf.mxu0
    %v1102 = vadd.f32 0.0, %v1101
    %v1103 = vpop.f32.mrf.mxu0
    %1104 = vmatprep.mubr.f32.mxu0 0.0
    %1105 = vmatmul.mubr.f32.gmra.mxu0 %v1023
    %v1106 = vpop.f32.mrf.mxu0
    %v1107 = vadd.f32 0.0, %v1106
    %v1108 = vpop.f32.mrf.mxu0
    %1109 = vdwg.mxu0
    %v1110 = vsel %vm140, %v1092, 0.0
    %v1111 = vsel %vm140, %v1097, 0.0
    %v1112 = vadd.f32 %v1110, %v1111
    %v1113 = vsel %vm140, %v1102, 0.0
    %v1114 = vadd.f32 %v1112, %v1113
    %v1115 = vsel %vm140, %v1107, 0.0
    %v1116 = vadd.f32 %v1114, %v1115
    %v1117 = vrot.slane %v1116, 4
    %v1118 = vadd.f32 %v1116, %v1117
    %v1119 = vrot.slane %v1118, 2
    %v1120 = vadd.f32 %v1118, %v1119
    %v1121 = vrot.slane %v1120, 1
    %v1122 = vadd.f32 %v1120, %v1121
    %v1123 = vmul.f32 %v1122, 0.001953125
    %v1124 = vadd.f32 %v1123, 1e-05
    %v1125 = vrsqrt.pop %v1124
    %v1126 = vmul.f32 %v892, %v1125
    %v1127 = vmul.f32 %v1004, %v1126
    %v1128 = vsub.f32 %v893, %v1127
    %v1130 = vlaneseq
    %v1131 = vshrl.u32 %v1130, 7
    %v1132 = vsub.s32 0, %v1131
    %v1133 = vrot.slane %v1126, %v1132
    %v1135 = vmul.f32 %v888, %v1133
    %v1136 = vmul.f32 %v889, %v1133
    %v1137 = vmul.f32 %v890, %v1133
    %v1138 = vmul.f32 %v891, %v1133
    %v1140 = vlaneseq
    %v1141 = vshrl.u32 %v1140, 7
    %v1142 = vsub.s32 0, %v1141
    %v1143 = vrot.slane %v1128, %v1142
    %v1145 = vadd.f32 %v1135, %v1143
    %v1146 = vadd.f32 %v1136, %v1143
    %v1147 = vadd.f32 %v1137, %v1143
    %v1148 = vadd.f32 %v1138, %v1143
    %v1149 = vmax.f32 %v1145, 0.0
    %v1150 = vmax.f32 %v1146, 0.0
    %v1151 = vmax.f32 %v1147, 0.0
    %v1152 = vmax.f32 %v1148, 0.0
    %v1153 = vld [vmem:[#allocation11] sm:$0xff]
    %v1154 = vld [vmem:[#allocation11 + $0x8] sm:$0xff]
    %v1155 = vld [vmem:[#allocation11 + $0x10] sm:$0xff]
    %v1156 = vld [vmem:[#allocation11 + $0x18] sm:$0xff]
    %v1157 = vld [vmem:[#allocation11 + $0x20] sm:$0xff]
    %v1158 = vld [vmem:[#allocation11 + $0x28] sm:$0xff]
    %v1159 = vld [vmem:[#allocation11 + $0x30] sm:$0xff]
    %v1160 = vld [vmem:[#allocation11 + $0x38] sm:$0xff]
    %v1162 = vsel %vm140, %v1149, 0
    %v1165 = vsel %vm140, %v1150, 0
    %v1168 = vsel %vm140, %v1151, 0
    %v1171 = vsel %vm140, %v1152, 0
    %1173 = vmatprep.subr.mxu0 0.0
    %1174 = vmatpush1.msra.mxu0 0.0
    %1175 = vmatprep.subr.mxu0 0.0
    %1176 = vmatpush1.msra.mxu0 0.0
    %1177 = vmatprep.subr.mxu0 0.0
    %1178 = vmatpush1.msra.mxu0 0.0
    %1179 = vmatprep.subr.mxu0 0.0
    %1180 = vmatpush1.msra.mxu0 0.0
    %1181 = vmatprep.subr.mxu0 0.0
    %1182 = vmatpush1.msra.mxu0 0.0
    %1183 = vmatprep.subr.mxu0 0.0
    %1184 = vmatpush1.msra.mxu0 0.0
    %1185 = vmatprep.subr.mxu0 0.0
    %1186 = vmatpush1.msra.mxu0 0.0
    %1187 = vmatprep.subr.mxu0 0.0
    %1188 = vmatpush1.msra.mxu0 0.0
    %1189 = vmatprep.subr.mxu0 0.0
    %1190 = vmatpush1.msra.mxu0 %v1160
    %1191 = vmatprep.subr.mxu0 0.0
    %1192 = vmatpush1.msra.mxu0 %v1159
    %1193 = vmatprep.subr.mxu0 0.0
    %1194 = vmatpush1.msra.mxu0 %v1158
    %1195 = vmatprep.subr.mxu0 0.0
    %1196 = vmatpush1.msra.mxu0 %v1157
    %1197 = vmatprep.subr.mxu0 0.0
    %1198 = vmatpush1.msra.mxu0 %v1156
    %1199 = vmatprep.subr.mxu0 0.0
    %1200 = vmatpush1.msra.mxu0 %v1155
    %1201 = vmatprep.subr.mxu0 0.0
    %1202 = vmatpush1.msra.mxu0 %v1154
    %1203 = vmatprep.subr.mxu0 0.0
    %1204 = vmatpush1.msra.mxu0 %v1153
    %1205 = vmatprep.subr.mxu0 0.0
    %1206 = vmatpush2.msra.mxu0 0.0
    %1207 = vmatprep.subr.mxu0 0.0
    %1208 = vmatpush2.msra.mxu0 0.0
    %1209 = vmatprep.subr.mxu0 0.0
    %1210 = vmatpush2.msra.mxu0 0.0
    %1211 = vmatprep.subr.mxu0 0.0
    %1212 = vmatpush2.msra.mxu0 0.0
    %1213 = vmatprep.subr.mxu0 0.0
    %1214 = vmatpush2.msra.mxu0 0.0
    %1215 = vmatprep.subr.mxu0 0.0
    %1216 = vmatpush2.msra.mxu0 0.0
    %1217 = vmatprep.subr.mxu0 0.0
    %1218 = vmatpush2.msra.mxu0 0.0
    %1219 = vmatprep.subr.mxu0 0.0
    %1220 = vmatpush2.msra.mxu0 0.0
    %1221 = vmatprep.subr.mxu0 0.0
    %1222 = vmatpush2.msra.mxu0 0.0
    %1223 = vmatprep.subr.mxu0 0.0
    %1224 = vmatpush2.msra.mxu0 0.0
    %1225 = vmatprep.subr.mxu0 0.0
    %1226 = vmatpush2.msra.mxu0 0.0
    %1227 = vmatprep.subr.mxu0 0.0
    %1228 = vmatpush2.msra.mxu0 0.0
    %1229 = vmatprep.subr.mxu0 0.0
    %1230 = vmatpush2.msra.mxu0 0.0
    %1231 = vmatprep.subr.mxu0 0.0
    %1232 = vmatpush2.msra.mxu0 0.0
    %1233 = vmatprep.subr.mxu0 0.0
    %1234 = vmatpush2.msra.mxu0 0.0
    %1235 = vmatprep.subr.mxu0 0.0
    %1236 = vmatpush2.msra.mxu0 0.0
    %1237 = vmatprep.mubr.f32.mxu0 0.0
    %1238 = vmatmul.mubr.f32.gmra.mxu0 %v1162
    %v1239 = vpop.f32.mrf.mxu0
    %v1240 = vadd.f32 0.0, %v1239
    %v1241 = vpop.f32.mrf.mxu0
    %1242 = vmatprep.mubr.f32.mxu0 0.0
    %1243 = vmatmul.mubr.f32.gmra.mxu0 %v1165
    %v1244 = vpop.f32.mrf.mxu0
    %v1245 = vadd.f32 0.0, %v1244
    %v1246 = vpop.f32.mrf.mxu0
    %1247 = vmatprep.mubr.f32.mxu0 0.0
    %1248 = vmatmul.mubr.f32.gmra.mxu0 %v1168
    %v1249 = vpop.f32.mrf.mxu0
    %v1250 = vadd.f32 0.0, %v1249
    %v1251 = vpop.f32.mrf.mxu0
    %1252 = vmatprep.mubr.f32.mxu0 0.0
    %1253 = vmatmul.mubr.f32.gmra.mxu0 %v1171
    %v1254 = vpop.f32.mrf.mxu0
    %v1255 = vadd.f32 0.0, %v1254
    %v1256 = vpop.f32.mrf.mxu0
    %1257 = vdwg.mxu0
    %s1258 = scalar_lea.vmem [#allocation11], 64
    %v1259 = vld [vmem:[%s1258] sm:$0xff]
    %v1260 = vld [vmem:[%s1258 + $0x8] sm:$0xff]
    %v1261 = vld [vmem:[%s1258 + $0x10] sm:$0xff]
    %v1262 = vld [vmem:[%s1258 + $0x18] sm:$0xff]
    %v1263 = vld [vmem:[%s1258 + $0x20] sm:$0xff]
    %v1264 = vld [vmem:[%s1258 + $0x28] sm:$0xff]
    %v1265 = vld [vmem:[%s1258 + $0x30] sm:$0xff]
    %v1266 = vld [vmem:[%s1258 + $0x38] sm:$0xff]
    %1267 = vmatprep.subr.mxu0 0.0
    %1268 = vmatpush1.msra.mxu0 0.0
    %1269 = vmatprep.subr.mxu0 0.0
    %1270 = vmatpush1.msra.mxu0 0.0
    %1271 = vmatprep.subr.mxu0 0.0
    %1272 = vmatpush1.msra.mxu0 0.0
    %1273 = vmatprep.subr.mxu0 0.0
    %1274 = vmatpush1.msra.mxu0 0.0
    %1275 = vmatprep.subr.mxu0 0.0
    %1276 = vmatpush1.msra.mxu0 0.0
    %1277 = vmatprep.subr.mxu0 0.0
    %1278 = vmatpush1.msra.mxu0 0.0
    %1279 = vmatprep.subr.mxu0 0.0
    %1280 = vmatpush1.msra.mxu0 0.0
    %1281 = vmatprep.subr.mxu0 0.0
    %1282 = vmatpush1.msra.mxu0 0.0
    %1283 = vmatprep.subr.mxu0 0.0
    %1284 = vmatpush1.msra.mxu0 %v1266
    %1285 = vmatprep.subr.mxu0 0.0
    %1286 = vmatpush1.msra.mxu0 %v1265
    %1287 = vmatprep.subr.mxu0 0.0
    %1288 = vmatpush1.msra.mxu0 %v1264
    %1289 = vmatprep.subr.mxu0 0.0
    %1290 = vmatpush1.msra.mxu0 %v1263
    %1291 = vmatprep.subr.mxu0 0.0
    %1292 = vmatpush1.msra.mxu0 %v1262
    %1293 = vmatprep.subr.mxu0 0.0
    %1294 = vmatpush1.msra.mxu0 %v1261
    %1295 = vmatprep.subr.mxu0 0.0
    %1296 = vmatpush1.msra.mxu0 %v1260
    %1297 = vmatprep.subr.mxu0 0.0
    %1298 = vmatpush1.msra.mxu0 %v1259
    %1299 = vmatprep.subr.mxu0 0.0
    %1300 = vmatpush2.msra.mxu0 0.0
    %1301 = vmatprep.subr.mxu0 0.0
    %1302 = vmatpush2.msra.mxu0 0.0
    %1303 = vmatprep.subr.mxu0 0.0
    %1304 = vmatpush2.msra.mxu0 0.0
    %1305 = vmatprep.subr.mxu0 0.0
    %1306 = vmatpush2.msra.mxu0 0.0
    %1307 = vmatprep.subr.mxu0 0.0
    %1308 = vmatpush2.msra.mxu0 0.0
    %1309 = vmatprep.subr.mxu0 0.0
    %1310 = vmatpush2.msra.mxu0 0.0
    %1311 = vmatprep.subr.mxu0 0.0
    %1312 = vmatpush2.msra.mxu0 0.0
    %1313 = vmatprep.subr.mxu0 0.0
    %1314 = vmatpush2.msra.mxu0 0.0
    %1315 = vmatprep.subr.mxu0 0.0
    %1316 = vmatpush2.msra.mxu0 0.0
    %1317 = vmatprep.subr.mxu0 0.0
    %1318 = vmatpush2.msra.mxu0 0.0
    %1319 = vmatprep.subr.mxu0 0.0
    %1320 = vmatpush2.msra.mxu0 0.0
    %1321 = vmatprep.subr.mxu0 0.0
    %1322 = vmatpush2.msra.mxu0 0.0
    %1323 = vmatprep.subr.mxu0 0.0
    %1324 = vmatpush2.msra.mxu0 0.0
    %1325 = vmatprep.subr.mxu0 0.0
    %1326 = vmatpush2.msra.mxu0 0.0
    %1327 = vmatprep.subr.mxu0 0.0
    %1328 = vmatpush2.msra.mxu0 0.0
    %1329 = vmatprep.subr.mxu0 0.0
    %1330 = vmatpush2.msra.mxu0 0.0
    %1331 = vmatprep.mubr.f32.mxu0 0.0
    %1332 = vmatmul.mubr.f32.gmra.mxu0 %v1162
    %v1333 = vpop.f32.mrf.mxu0
    %v1334 = vadd.f32 0.0, %v1333
    %v1335 = vpop.f32.mrf.mxu0
    %1336 = vmatprep.mubr.f32.mxu0 0.0
    %1337 = vmatmul.mubr.f32.gmra.mxu0 %v1165
    %v1338 = vpop.f32.mrf.mxu0
    %v1339 = vadd.f32 0.0, %v1338
    %v1340 = vpop.f32.mrf.mxu0
    %1341 = vmatprep.mubr.f32.mxu0 0.0
    %1342 = vmatmul.mubr.f32.gmra.mxu0 %v1168
    %v1343 = vpop.f32.mrf.mxu0
    %v1344 = vadd.f32 0.0, %v1343
    %v1345 = vpop.f32.mrf.mxu0
    %1346 = vmatprep.mubr.f32.mxu0 0.0
    %1347 = vmatmul.mubr.f32.gmra.mxu0 %v1171
    %v1348 = vpop.f32.mrf.mxu0
    %v1349 = vadd.f32 0.0, %v1348
    %v1350 = vpop.f32.mrf.mxu0
    %1351 = vdwg.mxu0
    %s1352 = scalar_lea.vmem [#allocation11], 128
    %v1353 = vld [vmem:[%s1352] sm:$0xff]
    %v1354 = vld [vmem:[%s1352 + $0x8] sm:$0xff]
    %v1355 = vld [vmem:[%s1352 + $0x10] sm:$0xff]
    %v1356 = vld [vmem:[%s1352 + $0x18] sm:$0xff]
    %v1357 = vld [vmem:[%s1352 + $0x20] sm:$0xff]
    %v1358 = vld [vmem:[%s1352 + $0x28] sm:$0xff]
    %v1359 = vld [vmem:[%s1352 + $0x30] sm:$0xff]
    %v1360 = vld [vmem:[%s1352 + $0x38] sm:$0xff]
    %1361 = vmatprep.subr.mxu0 0.0
    %1362 = vmatpush1.msra.mxu0 0.0
    %1363 = vmatprep.subr.mxu0 0.0
    %1364 = vmatpush1.msra.mxu0 0.0
    %1365 = vmatprep.subr.mxu0 0.0
    %1366 = vmatpush1.msra.mxu0 0.0
    %1367 = vmatprep.subr.mxu0 0.0
    %1368 = vmatpush1.msra.mxu0 0.0
    %1369 = vmatprep.subr.mxu0 0.0
    %1370 = vmatpush1.msra.mxu0 0.0
    %1371 = vmatprep.subr.mxu0 0.0
    %1372 = vmatpush1.msra.mxu0 0.0
    %1373 = vmatprep.subr.mxu0 0.0
    %1374 = vmatpush1.msra.mxu0 0.0
    %1375 = vmatprep.subr.mxu0 0.0
    %1376 = vmatpush1.msra.mxu0 0.0
    %1377 = vmatprep.subr.mxu0 0.0
    %1378 = vmatpush1.msra.mxu0 %v1360
    %1379 = vmatprep.subr.mxu0 0.0
    %1380 = vmatpush1.msra.mxu0 %v1359
    %1381 = vmatprep.subr.mxu0 0.0
    %1382 = vmatpush1.msra.mxu0 %v1358
    %1383 = vmatprep.subr.mxu0 0.0
    %1384 = vmatpush1.msra.mxu0 %v1357
    %1385 = vmatprep.subr.mxu0 0.0
    %1386 = vmatpush1.msra.mxu0 %v1356
    %1387 = vmatprep.subr.mxu0 0.0
    %1388 = vmatpush1.msra.mxu0 %v1355
    %1389 = vmatprep.subr.mxu0 0.0
    %1390 = vmatpush1.msra.mxu0 %v1354
    %1391 = vmatprep.subr.mxu0 0.0
    %1392 = vmatpush1.msra.mxu0 %v1353
    %1393 = vmatprep.subr.mxu0 0.0
    %1394 = vmatpush2.msra.mxu0 0.0
    %1395 = vmatprep.subr.mxu0 0.0
    %1396 = vmatpush2.msra.mxu0 0.0
    %1397 = vmatprep.subr.mxu0 0.0
    %1398 = vmatpush2.msra.mxu0 0.0
    %1399 = vmatprep.subr.mxu0 0.0
    %1400 = vmatpush2.msra.mxu0 0.0
    %1401 = vmatprep.subr.mxu0 0.0
    %1402 = vmatpush2.msra.mxu0 0.0
    %1403 = vmatprep.subr.mxu0 0.0
    %1404 = vmatpush2.msra.mxu0 0.0
    %1405 = vmatprep.subr.mxu0 0.0
    %1406 = vmatpush2.msra.mxu0 0.0
    %1407 = vmatprep.subr.mxu0 0.0
    %1408 = vmatpush2.msra.mxu0 0.0
    %1409 = vmatprep.subr.mxu0 0.0
    %1410 = vmatpush2.msra.mxu0 0.0
    %1411 = vmatprep.subr.mxu0 0.0
    %1412 = vmatpush2.msra.mxu0 0.0
    %1413 = vmatprep.subr.mxu0 0.0
    %1414 = vmatpush2.msra.mxu0 0.0
    %1415 = vmatprep.subr.mxu0 0.0
    %1416 = vmatpush2.msra.mxu0 0.0
    %1417 = vmatprep.subr.mxu0 0.0
    %1418 = vmatpush2.msra.mxu0 0.0
    %1419 = vmatprep.subr.mxu0 0.0
    %1420 = vmatpush2.msra.mxu0 0.0
    %1421 = vmatprep.subr.mxu0 0.0
    %1422 = vmatpush2.msra.mxu0 0.0
    %1423 = vmatprep.subr.mxu0 0.0
    %1424 = vmatpush2.msra.mxu0 0.0
    %1425 = vmatprep.mubr.f32.mxu0 0.0
    %1426 = vmatmul.mubr.f32.gmra.mxu0 %v1162
    %v1427 = vpop.f32.mrf.mxu0
    %v1428 = vadd.f32 0.0, %v1427
    %v1429 = vpop.f32.mrf.mxu0
    %1430 = vmatprep.mubr.f32.mxu0 0.0
    %1431 = vmatmul.mubr.f32.gmra.mxu0 %v1165
    %v1432 = vpop.f32.mrf.mxu0
    %v1433 = vadd.f32 0.0, %v1432
    %v1434 = vpop.f32.mrf.mxu0
    %1435 = vmatprep.mubr.f32.mxu0 0.0
    %1436 = vmatmul.mubr.f32.gmra.mxu0 %v1168
    %v1437 = vpop.f32.mrf.mxu0
    %v1438 = vadd.f32 0.0, %v1437
    %v1439 = vpop.f32.mrf.mxu0
    %1440 = vmatprep.mubr.f32.mxu0 0.0
    %1441 = vmatmul.mubr.f32.gmra.mxu0 %v1171
    %v1442 = vpop.f32.mrf.mxu0
    %v1443 = vadd.f32 0.0, %v1442
    %v1444 = vpop.f32.mrf.mxu0
    %1445 = vdwg.mxu0
    %1446 = vmatprep.subr.mxu0 0.0
    %1447 = vmatpush1.msra.mxu0 0.0
    %1448 = vmatprep.subr.mxu0 0.0
    %1449 = vmatpush1.msra.mxu0 0.0
    %1450 = vmatprep.subr.mxu0 0.0
    %1451 = vmatpush1.msra.mxu0 0.0
    %1452 = vmatprep.subr.mxu0 0.0
    %1453 = vmatpush1.msra.mxu0 0.0
    %1454 = vmatprep.subr.mxu0 0.0
    %1455 = vmatpush1.msra.mxu0 0.0
    %1456 = vmatprep.subr.mxu0 0.0
    %1457 = vmatpush1.msra.mxu0 0.0
    %1458 = vmatprep.subr.mxu0 0.0
    %1459 = vmatpush1.msra.mxu0 0.0
    %1460 = vmatprep.subr.mxu0 0.0
    %1461 = vmatpush1.msra.mxu0 0.0
    %1462 = vmatprep.subr.mxu0 0.0
    %1463 = vmatpush1.msra.mxu0 0.0
    %1464 = vmatprep.subr.mxu0 0.0
    %1465 = vmatpush1.msra.mxu0 0.0
    %1466 = vmatprep.subr.mxu0 0.0
    %1467 = vmatpush1.msra.mxu0 0.0
    %1468 = vmatprep.subr.mxu0 0.0
    %1469 = vmatpush1.msra.mxu0 0.0
    %1470 = vmatprep.subr.mxu0 0.0
    %1471 = vmatpush1.msra.mxu0 %v1255
    %1472 = vmatprep.subr.mxu0 0.0
    %1473 = vmatpush1.msra.mxu0 %v1250
    %1474 = vmatprep.subr.mxu0 0.0
    %1475 = vmatpush1.msra.mxu0 %v1245
    %1476 = vmatprep.subr.mxu0 0.0
    %1477 = vmatpush1.msra.mxu0 %v1240
    %1478 = vmatprep.subr.mxu0 0.0
    %1479 = vmatpush2.msra.mxu0 0.0
    %1480 = vmatprep.subr.mxu0 0.0
    %1481 = vmatpush2.msra.mxu0 0.0
    %1482 = vmatprep.subr.mxu0 0.0
    %1483 = vmatpush2.msra.mxu0 0.0
    %1484 = vmatprep.subr.mxu0 0.0
    %1485 = vmatpush2.msra.mxu0 0.0
    %1486 = vmatprep.subr.mxu0 0.0
    %1487 = vmatpush2.msra.mxu0 0.0
    %1488 = vmatprep.subr.mxu0 0.0
    %1489 = vmatpush2.msra.mxu0 0.0
    %1490 = vmatprep.subr.mxu0 0.0
    %1491 = vmatpush2.msra.mxu0 0.0
    %1492 = vmatprep.subr.mxu0 0.0
    %1493 = vmatpush2.msra.mxu0 0.0
    %1494 = vmatprep.subr.mxu0 0.0
    %1495 = vmatpush2.msra.mxu0 0.0
    %1496 = vmatprep.subr.mxu0 0.0
    %1497 = vmatpush2.msra.mxu0 0.0
    %1498 = vmatprep.subr.mxu0 0.0
    %1499 = vmatpush2.msra.mxu0 0.0
    %1500 = vmatprep.subr.mxu0 0.0
    %1501 = vmatpush2.msra.mxu0 0.0
    %1502 = vmatprep.subr.mxu0 0.0
    %1503 = vmatpush2.msra.mxu0 0.0
    %1504 = vmatprep.subr.mxu0 0.0
    %1505 = vmatpush2.msra.mxu0 0.0
    %1506 = vmatprep.subr.mxu0 0.0
    %1507 = vmatpush2.msra.mxu0 0.0
    %1508 = vmatprep.subr.mxu0 0.0
    %1509 = vmatpush2.msra.mxu0 0.0
    %1510 = vmatprep.mubr.f32.mxu0 0.0
    %1511 = vmatmul.mubr.f32.gmra.mxu0 %v695
    %v1512 = vpop.f32.mrf.mxu0
    %v1513 = vadd.f32 %v1334, %v1512
    %v1514 = vpop.f32.mrf.mxu0
    %1515 = vmatprep.mubr.f32.mxu0 0.0
    %1516 = vmatmul.mubr.f32.gmra.mxu0 %v698
    %v1517 = vpop.f32.mrf.mxu0
    %v1518 = vadd.f32 %v1339, %v1517
    %v1519 = vpop.f32.mrf.mxu0
    %1520 = vmatprep.mubr.f32.mxu0 0.0
    %1521 = vmatmul.mubr.f32.gmra.mxu0 %v701
    %v1522 = vpop.f32.mrf.mxu0
    %v1523 = vadd.f32 %v1344, %v1522
    %v1524 = vpop.f32.mrf.mxu0
    %1525 = vmatprep.mubr.f32.mxu0 0.0
    %1526 = vmatmul.mubr.f32.gmra.mxu0 %v704
    %v1527 = vpop.f32.mrf.mxu0
    %v1528 = vadd.f32 %v1349, %v1527
    %v1529 = vpop.f32.mrf.mxu0
    %1530 = vdwg.mxu0
    %1531 = vmatprep.subr.mxu0 0.0
    %1532 = vmatpush1.msra.mxu0 0.0
    %1533 = vmatprep.subr.mxu0 0.0
    %1534 = vmatpush1.msra.mxu0 0.0
    %1535 = vmatprep.subr.mxu0 0.0
    %1536 = vmatpush1.msra.mxu0 0.0
    %1537 = vmatprep.subr.mxu0 0.0
    %1538 = vmatpush1.msra.mxu0 0.0
    %1539 = vmatprep.subr.mxu0 0.0
    %1540 = vmatpush1.msra.mxu0 0.0
    %1541 = vmatprep.subr.mxu0 0.0
    %1542 = vmatpush1.msra.mxu0 0.0
    %1543 = vmatprep.subr.mxu0 0.0
    %1544 = vmatpush1.msra.mxu0 0.0
    %1545 = vmatprep.subr.mxu0 0.0
    %1546 = vmatpush1.msra.mxu0 0.0
    %1547 = vmatprep.subr.mxu0 0.0
    %1548 = vmatpush1.msra.mxu0 0.0
    %1549 = vmatprep.subr.mxu0 0.0
    %1550 = vmatpush1.msra.mxu0 0.0
    %1551 = vmatprep.subr.mxu0 0.0
    %1552 = vmatpush1.msra.mxu0 0.0
    %1553 = vmatprep.subr.mxu0 0.0
    %1554 = vmatpush1.msra.mxu0 0.0
    %1555 = vmatprep.subr.mxu0 0.0
    %1556 = vmatpush1.msra.mxu0 %v1443
    %1557 = vmatprep.subr.mxu0 0.0
    %1558 = vmatpush1.msra.mxu0 %v1438
    %1559 = vmatprep.subr.mxu0 0.0
    %1560 = vmatpush1.msra.mxu0 %v1433
    %1561 = vmatprep.subr.mxu0 0.0
    %1562 = vmatpush1.msra.mxu0 %v1428
    %1563 = vmatprep.subr.mxu0 0.0
    %1564 = vmatpush2.msra.mxu0 0.0
    %1565 = vmatprep.subr.mxu0 0.0
    %1566 = vmatpush2.msra.mxu0 0.0
    %1567 = vmatprep.subr.mxu0 0.0
    %1568 = vmatpush2.msra.mxu0 0.0
    %1569 = vmatprep.subr.mxu0 0.0
    %1570 = vmatpush2.msra.mxu0 0.0
    %1571 = vmatprep.subr.mxu0 0.0
    %1572 = vmatpush2.msra.mxu0 0.0
    %1573 = vmatprep.subr.mxu0 0.0
    %1574 = vmatpush2.msra.mxu0 0.0
    %1575 = vmatprep.subr.mxu0 0.0
    %1576 = vmatpush2.msra.mxu0 0.0
    %1577 = vmatprep.subr.mxu0 0.0
    %1578 = vmatpush2.msra.mxu0 0.0
    %1579 = vmatprep.subr.mxu0 0.0
    %1580 = vmatpush2.msra.mxu0 0.0
    %1581 = vmatprep.subr.mxu0 0.0
    %1582 = vmatpush2.msra.mxu0 0.0
    %1583 = vmatprep.subr.mxu0 0.0
    %1584 = vmatpush2.msra.mxu0 0.0
    %1585 = vmatprep.subr.mxu0 0.0
    %1586 = vmatpush2.msra.mxu0 0.0
    %1587 = vmatprep.subr.mxu0 0.0
    %1588 = vmatpush2.msra.mxu0 0.0
    %1589 = vmatprep.subr.mxu0 0.0
    %1590 = vmatpush2.msra.mxu0 0.0
    %1591 = vmatprep.subr.mxu0 0.0
    %1592 = vmatpush2.msra.mxu0 0.0
    %1593 = vmatprep.subr.mxu0 0.0
    %1594 = vmatpush2.msra.mxu0 0.0
    %1595 = vmatprep.mubr.f32.mxu0 0.0
    %1596 = vmatmul.mubr.f32.gmra.mxu0 %v792
    %v1597 = vpop.f32.mrf.mxu0
    %v1598 = vadd.f32 0.0, %v1597
    %v1599 = vpop.f32.mrf.mxu0
    %1600 = vmatprep.mubr.f32.mxu0 0.0
    %1601 = vmatmul.mubr.f32.gmra.mxu0 %v795
    %v1602 = vpop.f32.mrf.mxu0
    %v1603 = vadd.f32 0.0, %v1602
    %v1604 = vpop.f32.mrf.mxu0
    %1605 = vmatprep.mubr.f32.mxu0 0.0
    %1606 = vmatmul.mubr.f32.gmra.mxu0 %v798
    %v1607 = vpop.f32.mrf.mxu0
    %v1608 = vadd.f32 0.0, %v1607
    %v1609 = vpop.f32.mrf.mxu0
    %1610 = vmatprep.mubr.f32.mxu0 0.0
    %1611 = vmatmul.mubr.f32.gmra.mxu0 %v801
    %v1612 = vpop.f32.mrf.mxu0
    %v1613 = vadd.f32 0.0, %v1612
    %v1614 = vpop.f32.mrf.mxu0
    %1615 = vdwg.mxu0
    %v1616 = vadd.f32 %v1513, %v1598
    %v1617 = vadd.f32 %v1518, %v1603
    %v1618 = vadd.f32 %v1523, %v1608
    %v1619 = vadd.f32 %v1528, %v1613
    %v1620 = vadd.f32 %v1616, %v118
    %v1621 = vadd.f32 %v1617, %v119
    %v1622 = vadd.f32 %v1618, %v120
    %v1623 = vadd.f32 %v1619, %v121
    %1624 = vst.msk [vmem:[#allocation13] sm:$0xff] %vm140, %v1620
    %1625 = vst.msk [vmem:[#allocation13 + $0x8] sm:$0xff] %vm140, %v1621
    %1626 = vst.msk [vmem:[#allocation13 + $0x10] sm:$0xff] %vm140, %v1622
    %1627 = vst.msk [vmem:[#allocation13 + $0x18] sm:$0xff] %vm140, %v1623
    // Predicated region
    $region66: #{tpu_custom_call.1} parent=1 // pred_check
      _
    $region67: #{tpu_custom_call.1} parent=1 // pred_check_branch
      %1629 = sbr.rel (0) target = $region69
    $region68: #{tpu_custom_call.1} parent=1 // pred_region
      %s1631 = ssub.s32 512, 512
      %1632 = vsyncadd [#allocation4], %s1631
      %s1633 = sshll.u32 [#allocation13], 4
      %s1634 = int_to_ptr.vmem [resolvable:$true] %s1633
      %1639 = dma.vmem_to_hbm [thread:$0]  %s1634, 512, %s10, [#allocation4], 128, 128, 8
    $region69: #{tpu_custom_call.1} parent=1 // pred_fallthru
      _
    // Predicated region
    $region70: #{tpu_custom_call.1} parent=1 // pred_check
      _
    $region71: #{tpu_custom_call.1} parent=1 // pred_check_branch
      %1641 = sbr.rel (0) target = $region73
    $region72: #{tpu_custom_call.1} parent=1 // pred_region
      %1642 = dma.done [#allocation4], 512
    $region73: #{tpu_custom_call.1} parent=1 // pred_fallthru
      _
    %1643 = vsyncpa [#allocation3], 1
    %1644 = vsyncpa [#allocation6], 1
    %1645 = vsyncpa [#allocation9], 1
    %1646 = vsyncpa [#allocation12], 1
    %1647 = vsyncpa [#allocation4], 1

</llo_original>
